<compile_context>
chip_gen: v6e
topology: v6e:2x2x1
jax: 0.10.0
libtpu: 0.0.40
codegen_flags: <defaults>
</compile_context>

<pallas_src>
import jax
import jax.numpy as jnp
from jax import lax
from jax.experimental import pallas as pl
from jax.experimental.pallas import tpu as pltpu


def _round_up(x: int, m: int) -> int:
    return ((x + m - 1) // m) * m


def _cdiv(a: int, b: int) -> int:
    return (a + b - 1) // b


def _vmem_config():
    """Generation-aware per-input-buffer tile budget and scoped-VMEM limit."""
    cap = 64 * 1024 * 1024  # conservative default == v7x per-TC VMEM
    try:
        info = pltpu.get_tpu_info()
        cap = int(getattr(info, "vmem_capacity_bytes", cap))
    except Exception:
        pass
    per_buf = min(16 * 1024 * 1024, cap // 8)       # ~16 MiB (128 MiB parts), ~8 MiB (v7x)
    vmem_limit = min(96 * 1024 * 1024, int(cap * 0.6))
    return per_buf, vmem_limit


def _make_kernel(T: int, tt: int, ch: int, kt: int, eps: float):
    """Kernel factory. tt = time tile, ch = lane-chunk (== accumulator width)."""
    rem = T - (kt - 1) * tt            # valid time elements in the last block (1..tt)
    n_full_last = rem // ch
    partial_last = rem % ch
    n_full_body = tt // ch
    inv_t = 1.0 / float(T)

    def kernel(x_ref, mean_ref, std_ref, s_ref, ss_ref):
        k = pl.program_id(1)

        @pl.when(k == 0)
        def _init():
            s_ref[...] = jnp.zeros_like(s_ref)
            ss_ref[...] = jnp.zeros_like(ss_ref)

        def add_chunk(c, valid=None):
            # (tb, D, ch) chunk: cast + (optional tail mask) + VPU accumulate.
            xc = x_ref[:, :, pl.ds(c * ch, ch)].astype(jnp.float32)
            if valid is not None:
                lane = lax.broadcasted_iota(jnp.int32, xc.shape, 2)
                xc = jnp.where(lane < valid, xc, 0.0)
            s_ref[...] += xc
            ss_ref[...] += xc * xc

        def accumulate(n_full, partial):
            for c in range(n_full):
                add_chunk(c)
            if partial > 0:
                add_chunk(n_full, partial)

        if kt == 1 or (n_full_last == n_full_body and partial_last == 0):
            # Every block has the same (fully valid) chunk plan.
            accumulate(n_full_last if kt == 1 else n_full_body,
                       partial_last if kt == 1 else 0)
        else:
            @pl.when(k < kt - 1)
            def _body():
                accumulate(n_full_body, 0)

            @pl.when(k == kt - 1)
            def _tail():
                accumulate(n_full_last, partial_last)

        @pl.when(k == kt - 1)
        def _finalize():
            # Single cross-lane reduce per batch block (hoisted out of the loop).
            s = jnp.sum(s_ref[...], axis=-1)
            ss = jnp.sum(ss_ref[...], axis=-1)
            mean = s * jnp.float32(inv_t)
            var = ss * jnp.float32(inv_t) - mean * mean
            # maximum-clamp == torch.where(var <= eps, eps, var) for var >= 0,
            # and also clamps tiny negatives from the single-pass formula.
            var = jnp.maximum(var, jnp.float32(eps))
            std = jnp.sqrt(var)
            mean_ref[...] = mean.astype(mean_ref.dtype)
            std_ref[...] = std.astype(std_ref.dtype)

    return kernel


def statistic_pooling(xs_pad: jax.Array, eps: float = 1e-12, *,
                      max_time_tile: int | None = None,
                      max_batch_tile: int = 128) -> jax.Array:
    """xs_pad: (B, D, T) -> (B, 2*D). Pools over dim 2 (time); ilens=None path."""
    B, D, T = xs_pad.shape
    itemsize = jnp.dtype(xs_pad.dtype).itemsize
    per_buf, vmem_limit = _vmem_config()

    # Lane-chunk width (== accumulator lane width).
    ch = T if T < 128 else 128

    # Batch tile: sublane aligned; keep >= 2 batch blocks when B allows so the
    # "parallel" batch axis can shard across both TensorCores on v7x.
    tb = min(_round_up(B, 8), max_batch_tile)
    if B >= 16:
        tb = min(tb, _round_up(_cdiv(B, 2), 8))
    # Prefer shrinking tb before tt so each DMA'd row stays long (>= ~512 elems).
    while tb > 8 and tb * D * itemsize * min(512, max(ch, T)) > per_buf:
        tb -= 8

    scratch_bytes = 2 * tb * D * ch * 4
    inp_budget = max(per_buf - scratch_bytes, tb * D * itemsize * ch)

    # Time tile: multiple of 128 (or whole T when T < 128); budget sized,
    # >= 512 when affordable, <= 4096 to bound the unrolled chunk count.
    if T < 128:
        tt = T
    else:
        t128 = _round_up(T, 128)
        tt = (inp_budget // (tb * D * itemsize)) // 128 * 128
        tt = max(128, min(tt, t128, 4096))
        if tt < 512 <= t128 and tb * D * itemsize * 512 * 2 <= 2 * per_buf:
            tt = 512
    if max_time_tile is not None:
        tt = max(ch, min(tt, _round_up(max_time_tile, ch)))

    kt = _cdiv(T, tt)
    nb = _cdiv(B, tb)

    kernel = _make_kernel(T, tt, ch, kt, float(eps))

    cost = pl.CostEstimate(
        flops=3 * B * D * T,
        transcendentals=B * D,
        bytes_accessed=B * D * T * itemsize + 2 * B * D * itemsize,
    )

    mean, std = pl.pallas_call(
        kernel,
        out_shape=(jax.ShapeDtypeStruct((B, D), xs_pad.dtype),
                   jax.ShapeDtypeStruct((B, D), xs_pad.dtype)),
        grid_spec=pltpu.PrefetchScalarGridSpec(
            num_scalar_prefetch=0,
            grid=(nb, kt),
            in_specs=[pl.BlockSpec((tb, D, tt), lambda b, k: (b, 0, k))],
            out_specs=[pl.BlockSpec((tb, D), lambda b, k: (b, 0)),
                       pl.BlockSpec((tb, D), lambda b, k: (b, 0))],
            scratch_shapes=[pltpu.VMEM((tb, D, ch), jnp.float32),   # sum(x) lane partials
                            pltpu.VMEM((tb, D, ch), jnp.float32)],  # sum(x^2) lane partials
        ),
        compiler_params=pltpu.CompilerParams(
            dimension_semantics=("parallel", "arbitrary"),
            vmem_limit_bytes=vmem_limit),
        cost_estimate=cost,
    )(xs_pad)

    # Identical memory order to torch.cat([mean, std], dim=1); tiny HBM op.
    return jnp.concatenate([mean, std], axis=1)


def statistic_pooling_ref(xs_pad: jax.Array, eps: float = 1e-12) -> jax.Array:
    # Pure-JAX reference mirroring the PyTorch forward (ilens=None), two-pass.
    x = xs_pad.astype(jnp.float32)
    T = x.shape[2]
    mean = jnp.sum(x, axis=2, keepdims=True) / T
    var = jnp.sum((x - mean) ** 2, axis=2, keepdims=True) / T
    mean = mean[:, :, 0]
    var = var[:, :, 0]
    mask = (var <= eps).astype(jnp.float32)
    var = (1.0 - mask) * var + mask * eps
    std = jnp.sqrt(var)
    return jnp.concatenate([mean, std], axis=1).astype(xs_pad.dtype)


if __name__ == "__main__":
    key = jax.random.PRNGKey(0)

    # Case 1: small shape consistent with the module (B=2, D=32, T=16); T < 128 path.
    B, D, T = 2, 32, 16
    x1 = jax.random.normal(key, (B, D, T), dtype=jnp.float32)
    out1 = jax.block_until_ready(statistic_pooling(x1))
    ref1 = statistic_pooling_ref(x1)
    assert out1.shape == (B, 2 * D), out1.shape
    assert jnp.allclose(out1, ref1, atol=1e-5, rtol=1e-5), "case 1 mismatch vs reference"

    # Case 2: ragged time tail (T % 128 != 0), single time block, ragged batch.
    B2, D2, T2 = 3, 64, 300
    x2 = jax.random.normal(jax.random.PRNGKey(0), (B2, D2, T2), dtype=jnp.float32)
    out2 = jax.block_until_ready(statistic_pooling(x2))
    ref2 = statistic_pooling_ref(x2)
    assert out2.shape == (B2, 2 * D2), out2.shape
    assert jnp.allclose(out2, ref2, atol=1e-4, rtol=1e-4), "case 2 mismatch vs reference"

    # Case 3: force multiple time blocks (kt > 1) to exercise the accumulator path.
    out3 = jax.block_until_ready(statistic_pooling(x2, max_time_tile=128))
    assert jnp.allclose(out3, ref2, atol=1e-4, rtol=1e-4), "case 3 mismatch vs reference"

    print("KERNEL_OK")
</pallas_src>

<mosaic_0001>
module attributes {stable_mosaic.version = 11 : i64} {
  func.func @kernel(%arg0: i32, %arg1: i32, %arg2: memref<8x32x16xf32, #tpu.memory_space<vmem>>, %arg3: memref<8x32xf32, #tpu.memory_space<vmem>>, %arg4: memref<8x32xf32, #tpu.memory_space<vmem>>, %arg5: memref<8x32x16xf32, #tpu.memory_space<vmem>>, %arg6: memref<8x32x16xf32, #tpu.memory_space<vmem>>) attributes {dimension_semantics = [#tpu.dimension_semantics<parallel>, #tpu.dimension_semantics<arbitrary>], iteration_bounds = array<i64: 1, 1>, scalar_prefetch = 0 : i64, scratch_operands = 2 : i64, tpu.core_type = #tpu.core_type<tc>, window_params = [{transform_indices = @transform_0, window_bounds = array<i64: 8, 32, 16>}, {transform_indices = @transform_1, window_bounds = array<i64: 8, 32>}, {transform_indices = @transform_2, window_bounds = array<i64: 8, 32>}]} {
    %c0_i32 = arith.constant 0 : i32
    %0 = arith.cmpi eq, %arg1, %c0_i32 : i32
    %1 = arith.extui %0 : i1 to i32
    %c0_i32_0 = arith.constant 0 : i32
    %2 = arith.cmpi ne, %1, %c0_i32_0 : i32
    scf.if %2 {
      %cst = arith.constant 0.000000e+00 : f32
      %14 = vector.broadcast %cst : f32 to vector<8x32x16xf32>
      %c0_17 = arith.constant 0 : index
      %c0_18 = arith.constant 0 : index
      %c0_19 = arith.constant 0 : index
      %15 = vector.load %arg5[%c0_17, %c0_18, %c0_19] : memref<8x32x16xf32, #tpu.memory_space<vmem>>, vector<8x32x16xf32>
      tpu.vector_store %arg5[%c0_17, %c0_18, %c0_19], %14 {strides = array<i32>} : memref<8x32x16xf32, #tpu.memory_space<vmem>>, vector<8x32x16xf32>,
      %cst_20 = arith.constant 0.000000e+00 : f32
      %16 = vector.broadcast %cst_20 : f32 to vector<8x32x16xf32>
      %c0_21 = arith.constant 0 : index
      %c0_22 = arith.constant 0 : index
      %c0_23 = arith.constant 0 : index
      %17 = vector.load %arg6[%c0_21, %c0_22, %c0_23] : memref<8x32x16xf32, #tpu.memory_space<vmem>>, vector<8x32x16xf32>
      tpu.vector_store %arg6[%c0_21, %c0_22, %c0_23], %16 {strides = array<i32>} : memref<8x32x16xf32, #tpu.memory_space<vmem>>, vector<8x32x16xf32>,
    } else {
    }
    %c0 = arith.constant 0 : index
    %c0_1 = arith.constant 0 : index
    %c0_2 = arith.constant 0 : index
    %3 = vector.load %arg2[%c0, %c0_1, %c0_2] : memref<8x32x16xf32, #tpu.memory_space<vmem>>, vector<8x32x16xf32>
    %c0_3 = arith.constant 0 : index
    %c0_4 = arith.constant 0 : index
    %c0_5 = arith.constant 0 : index
    %4 = vector.load %arg5[%c0_3, %c0_4, %c0_5] : memref<8x32x16xf32, #tpu.memory_space<vmem>>, vector<8x32x16xf32>
    %5 = arith.addf %4, %3 : vector<8x32x16xf32>
    %c0_6 = arith.constant 0 : index
    %c0_7 = arith.constant 0 : index
    %c0_8 = arith.constant 0 : index
    %6 = vector.load %arg5[%c0_6, %c0_7, %c0_8] : memref<8x32x16xf32, #tpu.memory_space<vmem>>, vector<8x32x16xf32>
    tpu.vector_store %arg5[%c0_6, %c0_7, %c0_8], %5 {strides = array<i32>} : memref<8x32x16xf32, #tpu.memory_space<vmem>>, vector<8x32x16xf32>,
    %c0_9 = arith.constant 0 : index
    %c0_10 = arith.constant 0 : index
    %c0_11 = arith.constant 0 : index
    %7 = vector.load %arg6[%c0_9, %c0_10, %c0_11] : memref<8x32x16xf32, #tpu.memory_space<vmem>>, vector<8x32x16xf32>
    %8 = arith.mulf %3, %3 : vector<8x32x16xf32>
    %9 = arith.addf %7, %8 : vector<8x32x16xf32>
    %c0_12 = arith.constant 0 : index
    %c0_13 = arith.constant 0 : index
    %c0_14 = arith.constant 0 : index
    %10 = vector.load %arg6[%c0_12, %c0_13, %c0_14] : memref<8x32x16xf32, #tpu.memory_space<vmem>>, vector<8x32x16xf32>
    tpu.vector_store %arg6[%c0_12, %c0_13, %c0_14], %9 {strides = array<i32>} : memref<8x32x16xf32, #tpu.memory_space<vmem>>, vector<8x32x16xf32>,
    %c0_i32_15 = arith.constant 0 : i32
    %11 = arith.cmpi eq, %arg1, %c0_i32_15 : i32
    %12 = arith.extui %11 : i1 to i32
    %c0_i32_16 = arith.constant 0 : i32
    %13 = arith.cmpi ne, %12, %c0_i32_16 : i32
    scf.if %13 {
      %c0_17 = arith.constant 0 : index
      %c0_18 = arith.constant 0 : index
      %c0_19 = arith.constant 0 : index
      %14 = vector.load %arg5[%c0_17, %c0_18, %c0_19] : memref<8x32x16xf32, #tpu.memory_space<vmem>>, vector<8x32x16xf32>
      %cst = arith.constant dense<0.000000e+00> : vector<8x32xf32>
      %15 = vector.multi_reduction <add>, %14, %cst [2] : vector<8x32x16xf32> to vector<8x32xf32>
      %c0_20 = arith.constant 0 : index
      %c0_21 = arith.constant 0 : index
      %c0_22 = arith.constant 0 : index
      %16 = vector.load %arg6[%c0_20, %c0_21, %c0_22] : memref<8x32x16xf32, #tpu.memory_space<vmem>>, vector<8x32x16xf32>
      %cst_23 = arith.constant dense<0.000000e+00> : vector<8x32xf32>
      %17 = vector.multi_reduction <add>, %16, %cst_23 [2] : vector<8x32x16xf32> to vector<8x32xf32>
      %cst_24 = arith.constant 6.250000e-02 : f32
      %18 = vector.broadcast %cst_24 : f32 to vector<8x32xf32>
      %19 = arith.mulf %15, %18 : vector<8x32xf32>
      %cst_25 = arith.constant 6.250000e-02 : f32
      %20 = vector.broadcast %cst_25 : f32 to vector<8x32xf32>
      %21 = arith.mulf %17, %20 : vector<8x32xf32>
      %22 = arith.mulf %19, %19 : vector<8x32xf32>
      %23 = arith.subf %21, %22 : vector<8x32xf32>
      %cst_26 = arith.constant 9.99999996E-13 : f32
      %24 = vector.broadcast %cst_26 : f32 to vector<8x32xf32>
      %25 = arith.maximumf %23, %24 : vector<8x32xf32>
      %26 = math.sqrt %25 : vector<8x32xf32>
      %c0_27 = arith.constant 0 : index
      %c0_28 = arith.constant 0 : index
      %27 = vector.load %arg3[%c0_27, %c0_28] : memref<8x32xf32, #tpu.memory_space<vmem>>, vector<8x32xf32>
      tpu.vector_store %arg3[%c0_27, %c0_28], %19 {strides = array<i32>} : memref<8x32xf32, #tpu.memory_space<vmem>>, vector<8x32xf32>,
      %c0_29 = arith.constant 0 : index
      %c0_30 = arith.constant 0 : index
      %28 = vector.load %arg4[%c0_29, %c0_30] : memref<8x32xf32, #tpu.memory_space<vmem>>, vector<8x32xf32>
      tpu.vector_store %arg4[%c0_29, %c0_30], %26 {strides = array<i32>} : memref<8x32xf32, #tpu.memory_space<vmem>>, vector<8x32xf32>,
    } else {
    }
    return
  }
  func.func @transform_0(%arg0: i32, %arg1: i32) -> (i32, i32, i32) {
    %c0_i32 = arith.constant 0 : i32
    %c0_i32_0 = arith.constant 0 : i32
    return %arg0, %c0_i32, %arg1 : i32, i32, i32
  }
  func.func @transform_1(%arg0: i32, %arg1: i32) -> (i32, i32) {
    %c0_i32 = arith.constant 0 : i32
    %c0_i32_0 = arith.constant 0 : i32
    return %arg0, %c0_i32 : i32, i32
  }
  func.func @transform_2(%arg0: i32, %arg1: i32) -> (i32, i32) {
    %c0_i32 = arith.constant 0 : i32
    %c0_i32_0 = arith.constant 0 : i32
    return %arg0, %c0_i32 : i32, i32
  }
}

</mosaic_0001>

<llo_original>
// kernel: tpu_custom_call.1
$region0: #{tpu_custom_call.1}
  #allocation0 [shape = 'u32[]', space=smem, size = 0x4, offset = 0x4, fixed_abs, tag = 'smem constant byte address 0x4 - core index']
  #allocation1 [shape = 'u32[144,128]{1,0:T(1,128)}', space=vmem, size = 0x12000, scoped, tag = 'internal scratch']
  #allocation2 [shape = 'f32[8,32,16]{2,1,0:T(8,128)}', space=vmem, size = 0x20000, scoped, tag = 'scratch operand']
  #allocation3 [shape = 'f32[8,32,16]{2,1,0:T(8,128)}', space=vmem, size = 0x20000, scoped, tag = 'scratch operand']
  %s0 = inlined_call_operand.vmem [shape: f32[2,32,16], index: 0, kind: input, shape index: {}]
  %s1 = inlined_call_operand.hbm [shape: f32[2,32], index: 1, kind: output, shape index: {0}]
  %s2 = inlined_call_operand.hbm [shape: f32[2,32], index: 2, kind: output, shape index: {1}]
  %3 = xla_tuple %s1, %s2
  %s4 = sld [smem:[#allocation0]]
  $region30: #{tpu_custom_call.1} parent=0
    _
  %s6 = ssub.s32 1, %s4
  %s7 = scalar_select 0, %s6, %s4
  $region1: #{tpu_custom_call.1} parent=0
    #allocation4 [shape = 'u8[4096]{0}', space=vmem, size = 0x1000, scoped, tag = 'output window, operand 0, single buffered']
    #allocation5 [shape = 's32[1]{0}', space=sflag, size = 0x4, scoped, tag = 'scoped memory for tpu_custom_call.1']
    #allocation6 [shape = 'u8[4096]{0}', space=vmem, size = 0x1000, scoped, tag = 'output window, operand 1, single buffered']
    #allocation7 [shape = 's32[1]{0}', space=sflag, size = 0x4, scoped, tag = 'scoped memory for tpu_custom_call.1']
    %8 = vsyncpa [#allocation5], 0
    %9 = vsyncpa [#allocation7], 0
    // Predicated region
    $region2: #{tpu_custom_call.1} parent=1 // pred_check
      _
    $region3: #{tpu_custom_call.1} parent=1 // pred_check_branch
      %11 = sbr.rel (0) target = $region5
    $region4: #{tpu_custom_call.1} parent=1 // pred_region
      _
    $region5: #{tpu_custom_call.1} parent=1 // pred_fallthru
      _
    %p12 = scmp.eq.s32.totalorder 0, 0
    // Predicated region
    $region6: #{tpu_custom_call.1} parent=1 // pred_check
      %p13 = pneg %p12
    $region7: #{tpu_custom_call.1} parent=1 // pred_check_branch
      %15 = sbr.rel (%p13) target = $region9
    $region8: #{tpu_custom_call.1} parent=1 // pred_region
      %vm16 = vcmask 130048
      %17 = vst.msk [vmem:[#allocation2] sm:$0xff] %vm16, 0.0
      %18 = vst.msk [vmem:[#allocation2 + $0x8] sm:$0xff] %vm16, 0.0
      %19 = vst.msk [vmem:[#allocation2 + $0x10] sm:$0xff] %vm16, 0.0
      %20 = vst.msk [vmem:[#allocation2 + $0x18] sm:$0xff] %vm16, 0.0
      %21 = vst.msk [vmem:[#allocation2 + $0x20] sm:$0xff] %vm16, 0.0
      %22 = vst.msk [vmem:[#allocation2 + $0x28] sm:$0xff] %vm16, 0.0
      %23 = vst.msk [vmem:[#allocation2 + $0x30] sm:$0xff] %vm16, 0.0
      %24 = vst.msk [vmem:[#allocation2 + $0x38] sm:$0xff] %vm16, 0.0
      %25 = vst.msk [vmem:[#allocation2 + $0x40] sm:$0xff] %vm16, 0.0
      %26 = vst.msk [vmem:[#allocation2 + $0x48] sm:$0xff] %vm16, 0.0
      %27 = vst.msk [vmem:[#allocation2 + $0x50] sm:$0xff] %vm16, 0.0
      %28 = vst.msk [vmem:[#allocation2 + $0x58] sm:$0xff] %vm16, 0.0
      %29 = vst.msk [vmem:[#allocation2 + $0x60] sm:$0xff] %vm16, 0.0
      %30 = vst.msk [vmem:[#allocation2 + $0x68] sm:$0xff] %vm16, 0.0
      %31 = vst.msk [vmem:[#allocation2 + $0x70] sm:$0xff] %vm16, 0.0
      %32 = vst.msk [vmem:[#allocation2 + $0x78] sm:$0xff] %vm16, 0.0
      %33 = vst.msk [vmem:[#allocation2 + $0x80] sm:$0xff] %vm16, 0.0
      %34 = vst.msk [vmem:[#allocation2 + $0x88] sm:$0xff] %vm16, 0.0
      %35 = vst.msk [vmem:[#allocation2 + $0x90] sm:$0xff] %vm16, 0.0
      %36 = vst.msk [vmem:[#allocation2 + $0x98] sm:$0xff] %vm16, 0.0
      %37 = vst.msk [vmem:[#allocation2 + $0xa0] sm:$0xff] %vm16, 0.0
      %38 = vst.msk [vmem:[#allocation2 + $0xa8] sm:$0xff] %vm16, 0.0
      %39 = vst.msk [vmem:[#allocation2 + $0xb0] sm:$0xff] %vm16, 0.0
      %40 = vst.msk [vmem:[#allocation2 + $0xb8] sm:$0xff] %vm16, 0.0
      %41 = vst.msk [vmem:[#allocation2 + $0xc0] sm:$0xff] %vm16, 0.0
      %42 = vst.msk [vmem:[#allocation2 + $0xc8] sm:$0xff] %vm16, 0.0
      %43 = vst.msk [vmem:[#allocation2 + $0xd0] sm:$0xff] %vm16, 0.0
      %44 = vst.msk [vmem:[#allocation2 + $0xd8] sm:$0xff] %vm16, 0.0
      %45 = vst.msk [vmem:[#allocation2 + $0xe0] sm:$0xff] %vm16, 0.0
      %46 = vst.msk [vmem:[#allocation2 + $0xe8] sm:$0xff] %vm16, 0.0
      %47 = vst.msk [vmem:[#allocation2 + $0xf0] sm:$0xff] %vm16, 0.0
      %48 = vst.msk [vmem:[#allocation2 + $0xf8] sm:$0xff] %vm16, 0.0
      %49 = vst.msk [vmem:[#allocation3] sm:$0xff] %vm16, 0.0
      %50 = vst.msk [vmem:[#allocation3 + $0x8] sm:$0xff] %vm16, 0.0
      %51 = vst.msk [vmem:[#allocation3 + $0x10] sm:$0xff] %vm16, 0.0
      %52 = vst.msk [vmem:[#allocation3 + $0x18] sm:$0xff] %vm16, 0.0
      %53 = vst.msk [vmem:[#allocation3 + $0x20] sm:$0xff] %vm16, 0.0
      %54 = vst.msk [vmem:[#allocation3 + $0x28] sm:$0xff] %vm16, 0.0
      %55 = vst.msk [vmem:[#allocation3 + $0x30] sm:$0xff] %vm16, 0.0
      %56 = vst.msk [vmem:[#allocation3 + $0x38] sm:$0xff] %vm16, 0.0
      %57 = vst.msk [vmem:[#allocation3 + $0x40] sm:$0xff] %vm16, 0.0
      %58 = vst.msk [vmem:[#allocation3 + $0x48] sm:$0xff] %vm16, 0.0
      %59 = vst.msk [vmem:[#allocation3 + $0x50] sm:$0xff] %vm16, 0.0
      %60 = vst.msk [vmem:[#allocation3 + $0x58] sm:$0xff] %vm16, 0.0
      %61 = vst.msk [vmem:[#allocation3 + $0x60] sm:$0xff] %vm16, 0.0
      %62 = vst.msk [vmem:[#allocation3 + $0x68] sm:$0xff] %vm16, 0.0
      %63 = vst.msk [vmem:[#allocation3 + $0x70] sm:$0xff] %vm16, 0.0
      %64 = vst.msk [vmem:[#allocation3 + $0x78] sm:$0xff] %vm16, 0.0
      %65 = vst.msk [vmem:[#allocation3 + $0x80] sm:$0xff] %vm16, 0.0
      %66 = vst.msk [vmem:[#allocation3 + $0x88] sm:$0xff] %vm16, 0.0
      %67 = vst.msk [vmem:[#allocation3 + $0x90] sm:$0xff] %vm16, 0.0
      %68 = vst.msk [vmem:[#allocation3 + $0x98] sm:$0xff] %vm16, 0.0
      %69 = vst.msk [vmem:[#allocation3 + $0xa0] sm:$0xff] %vm16, 0.0
      %70 = vst.msk [vmem:[#allocation3 + $0xa8] sm:$0xff] %vm16, 0.0
      %71 = vst.msk [vmem:[#allocation3 + $0xb0] sm:$0xff] %vm16, 0.0
      %72 = vst.msk [vmem:[#allocation3 + $0xb8] sm:$0xff] %vm16, 0.0
      %73 = vst.msk [vmem:[#allocation3 + $0xc0] sm:$0xff] %vm16, 0.0
      %74 = vst.msk [vmem:[#allocation3 + $0xc8] sm:$0xff] %vm16, 0.0
      %75 = vst.msk [vmem:[#allocation3 + $0xd0] sm:$0xff] %vm16, 0.0
      %76 = vst.msk [vmem:[#allocation3 + $0xd8] sm:$0xff] %vm16, 0.0
      %77 = vst.msk [vmem:[#allocation3 + $0xe0] sm:$0xff] %vm16, 0.0
      %78 = vst.msk [vmem:[#allocation3 + $0xe8] sm:$0xff] %vm16, 0.0
      %79 = vst.msk [vmem:[#allocation3 + $0xf0] sm:$0xff] %vm16, 0.0
      %80 = vst.msk [vmem:[#allocation3 + $0xf8] sm:$0xff] %vm16, 0.0
    $region9: #{tpu_custom_call.1} parent=1 // pred_fallthru
      _
    %v81 = vld [vmem:[%s0] sm:$0xff]
    %v82 = vld [vmem:[%s0 + $0x8] sm:$0xff]
    %v83 = vld [vmem:[%s0 + $0x10] sm:$0xff]
    %v84 = vld [vmem:[%s0 + $0x18] sm:$0xff]
    %v85 = vld [vmem:[%s0 + $0x20] sm:$0xff]
    %v86 = vld [vmem:[%s0 + $0x28] sm:$0xff]
    %v87 = vld [vmem:[%s0 + $0x30] sm:$0xff]
    %v88 = vld [vmem:[%s0 + $0x38] sm:$0xff]
    %v89 = vld [vmem:[%s0 + $0x40] sm:$0xff]
    %v90 = vld [vmem:[%s0 + $0x48] sm:$0xff]
    %v91 = vld [vmem:[%s0 + $0x50] sm:$0xff]
    %v92 = vld [vmem:[%s0 + $0x58] sm:$0xff]
    %v93 = vld [vmem:[%s0 + $0x60] sm:$0xff]
    %v94 = vld [vmem:[%s0 + $0x68] sm:$0xff]
    %v95 = vld [vmem:[%s0 + $0x70] sm:$0xff]
    %v96 = vld [vmem:[%s0 + $0x78] sm:$0xff]
    %v97 = vld [vmem:[%s0 + $0x80] sm:$0xff]
    %v98 = vld [vmem:[%s0 + $0x88] sm:$0xff]
    %v99 = vld [vmem:[%s0 + $0x90] sm:$0xff]
    %v100 = vld [vmem:[%s0 + $0x98] sm:$0xff]
    %v101 = vld [vmem:[%s0 + $0xa0] sm:$0xff]
    %v102 = vld [vmem:[%s0 + $0xa8] sm:$0xff]
    %v103 = vld [vmem:[%s0 + $0xb0] sm:$0xff]
    %v104 = vld [vmem:[%s0 + $0xb8] sm:$0xff]
    %v105 = vld [vmem:[%s0 + $0xc0] sm:$0xff]
    %v106 = vld [vmem:[%s0 + $0xc8] sm:$0xff]
    %v107 = vld [vmem:[%s0 + $0xd0] sm:$0xff]
    %v108 = vld [vmem:[%s0 + $0xd8] sm:$0xff]
    %v109 = vld [vmem:[%s0 + $0xe0] sm:$0xff]
    %v110 = vld [vmem:[%s0 + $0xe8] sm:$0xff]
    %v111 = vld [vmem:[%s0 + $0xf0] sm:$0xff]
    %v112 = vld [vmem:[%s0 + $0xf8] sm:$0xff]
    %v113 = vld [vmem:[#allocation2] sm:$0xff]
    %v114 = vld [vmem:[#allocation2 + $0x8] sm:$0xff]
    %v115 = vld [vmem:[#allocation2 + $0x10] sm:$0xff]
    %v116 = vld [vmem:[#allocation2 + $0x18] sm:$0xff]
    %v117 = vld [vmem:[#allocation2 + $0x20] sm:$0xff]
    %v118 = vld [vmem:[#allocation2 + $0x28] sm:$0xff]
    %v119 = vld [vmem:[#allocation2 + $0x30] sm:$0xff]
    %v120 = vld [vmem:[#allocation2 + $0x38] sm:$0xff]
    %v121 = vld [vmem:[#allocation2 + $0x40] sm:$0xff]
    %v122 = vld [vmem:[#allocation2 + $0x48] sm:$0xff]
    %v123 = vld [vmem:[#allocation2 + $0x50] sm:$0xff]
    %v124 = vld [vmem:[#allocation2 + $0x58] sm:$0xff]
    %v125 = vld [vmem:[#allocation2 + $0x60] sm:$0xff]
    %v126 = vld [vmem:[#allocation2 + $0x68] sm:$0xff]
    %v127 = vld [vmem:[#allocation2 + $0x70] sm:$0xff]
    %v128 = vld [vmem:[#allocation2 + $0x78] sm:$0xff]
    %v129 = vld [vmem:[#allocation2 + $0x80] sm:$0xff]
    %v130 = vld [vmem:[#allocation2 + $0x88] sm:$0xff]
    %v131 = vld [vmem:[#allocation2 + $0x90] sm:$0xff]
    %v132 = vld [vmem:[#allocation2 + $0x98] sm:$0xff]
    %v133 = vld [vmem:[#allocation2 + $0xa0] sm:$0xff]
    %v134 = vld [vmem:[#allocation2 + $0xa8] sm:$0xff]
    %v135 = vld [vmem:[#allocation2 + $0xb0] sm:$0xff]
    %v136 = vld [vmem:[#allocation2 + $0xb8] sm:$0xff]
    %v137 = vld [vmem:[#allocation2 + $0xc0] sm:$0xff]
    %v138 = vld [vmem:[#allocation2 + $0xc8] sm:$0xff]
    %v139 = vld [vmem:[#allocation2 + $0xd0] sm:$0xff]
    %v140 = vld [vmem:[#allocation2 + $0xd8] sm:$0xff]
    %v141 = vld [vmem:[#allocation2 + $0xe0] sm:$0xff]
    %v142 = vld [vmem:[#allocation2 + $0xe8] sm:$0xff]
    %v143 = vld [vmem:[#allocation2 + $0xf0] sm:$0xff]
    %v144 = vld [vmem:[#allocation2 + $0xf8] sm:$0xff]
    %v145 = vadd.f32 %v113, %v81
    %v146 = vadd.f32 %v114, %v82
    %v147 = vadd.f32 %v115, %v83
    %v148 = vadd.f32 %v116, %v84
    %v149 = vadd.f32 %v117, %v85
    %v150 = vadd.f32 %v118, %v86
    %v151 = vadd.f32 %v119, %v87
    %v152 = vadd.f32 %v120, %v88
    %v153 = vadd.f32 %v121, %v89
    %v154 = vadd.f32 %v122, %v90
    %v155 = vadd.f32 %v123, %v91
    %v156 = vadd.f32 %v124, %v92
    %v157 = vadd.f32 %v125, %v93
    %v158 = vadd.f32 %v126, %v94
    %v159 = vadd.f32 %v127, %v95
    %v160 = vadd.f32 %v128, %v96
    %v161 = vadd.f32 %v129, %v97
    %v162 = vadd.f32 %v130, %v98
    %v163 = vadd.f32 %v131, %v99
    %v164 = vadd.f32 %v132, %v100
    %v165 = vadd.f32 %v133, %v101
    %v166 = vadd.f32 %v134, %v102
    %v167 = vadd.f32 %v135, %v103
    %v168 = vadd.f32 %v136, %v104
    %v169 = vadd.f32 %v137, %v105
    %v170 = vadd.f32 %v138, %v106
    %v171 = vadd.f32 %v139, %v107
    %v172 = vadd.f32 %v140, %v108
    %v173 = vadd.f32 %v141, %v109
    %v174 = vadd.f32 %v142, %v110
    %v175 = vadd.f32 %v143, %v111
    %v176 = vadd.f32 %v144, %v112
    %vm177 = vcmask 130048
    %178 = vst.msk [vmem:[#allocation2] sm:$0xff] %vm177, %v145
    %179 = vst.msk [vmem:[#allocation2 + $0x8] sm:$0xff] %vm177, %v146
    %180 = vst.msk [vmem:[#allocation2 + $0x10] sm:$0xff] %vm177, %v147
    %181 = vst.msk [vmem:[#allocation2 + $0x18] sm:$0xff] %vm177, %v148
    %182 = vst.msk [vmem:[#allocation2 + $0x20] sm:$0xff] %vm177, %v149
    %183 = vst.msk [vmem:[#allocation2 + $0x28] sm:$0xff] %vm177, %v150
    %184 = vst.msk [vmem:[#allocation2 + $0x30] sm:$0xff] %vm177, %v151
    %185 = vst.msk [vmem:[#allocation2 + $0x38] sm:$0xff] %vm177, %v152
    %186 = vst.msk [vmem:[#allocation2 + $0x40] sm:$0xff] %vm177, %v153
    %187 = vst.msk [vmem:[#allocation2 + $0x48] sm:$0xff] %vm177, %v154
    %188 = vst.msk [vmem:[#allocation2 + $0x50] sm:$0xff] %vm177, %v155
    %189 = vst.msk [vmem:[#allocation2 + $0x58] sm:$0xff] %vm177, %v156
    %190 = vst.msk [vmem:[#allocation2 + $0x60] sm:$0xff] %vm177, %v157
    %191 = vst.msk [vmem:[#allocation2 + $0x68] sm:$0xff] %vm177, %v158
    %192 = vst.msk [vmem:[#allocation2 + $0x70] sm:$0xff] %vm177, %v159
    %193 = vst.msk [vmem:[#allocation2 + $0x78] sm:$0xff] %vm177, %v160
    %194 = vst.msk [vmem:[#allocation2 + $0x80] sm:$0xff] %vm177, %v161
    %195 = vst.msk [vmem:[#allocation2 + $0x88] sm:$0xff] %vm177, %v162
    %196 = vst.msk [vmem:[#allocation2 + $0x90] sm:$0xff] %vm177, %v163
    %197 = vst.msk [vmem:[#allocation2 + $0x98] sm:$0xff] %vm177, %v164
    %198 = vst.msk [vmem:[#allocation2 + $0xa0] sm:$0xff] %vm177, %v165
    %199 = vst.msk [vmem:[#allocation2 + $0xa8] sm:$0xff] %vm177, %v166
    %200 = vst.msk [vmem:[#allocation2 + $0xb0] sm:$0xff] %vm177, %v167
    %201 = vst.msk [vmem:[#allocation2 + $0xb8] sm:$0xff] %vm177, %v168
    %202 = vst.msk [vmem:[#allocation2 + $0xc0] sm:$0xff] %vm177, %v169
    %203 = vst.msk [vmem:[#allocation2 + $0xc8] sm:$0xff] %vm177, %v170
    %204 = vst.msk [vmem:[#allocation2 + $0xd0] sm:$0xff] %vm177, %v171
    %205 = vst.msk [vmem:[#allocation2 + $0xd8] sm:$0xff] %vm177, %v172
    %206 = vst.msk [vmem:[#allocation2 + $0xe0] sm:$0xff] %vm177, %v173
    %207 = vst.msk [vmem:[#allocation2 + $0xe8] sm:$0xff] %vm177, %v174
    %208 = vst.msk [vmem:[#allocation2 + $0xf0] sm:$0xff] %vm177, %v175
    %209 = vst.msk [vmem:[#allocation2 + $0xf8] sm:$0xff] %vm177, %v176
    %v210 = vld [vmem:[#allocation3] sm:$0xff]
    %v211 = vld [vmem:[#allocation3 + $0x8] sm:$0xff]
    %v212 = vld [vmem:[#allocation3 + $0x10] sm:$0xff]
    %v213 = vld [vmem:[#allocation3 + $0x18] sm:$0xff]
    %v214 = vld [vmem:[#allocation3 + $0x20] sm:$0xff]
    %v215 = vld [vmem:[#allocation3 + $0x28] sm:$0xff]
    %v216 = vld [vmem:[#allocation3 + $0x30] sm:$0xff]
    %v217 = vld [vmem:[#allocation3 + $0x38] sm:$0xff]
    %v218 = vld [vmem:[#allocation3 + $0x40] sm:$0xff]
    %v219 = vld [vmem:[#allocation3 + $0x48] sm:$0xff]
    %v220 = vld [vmem:[#allocation3 + $0x50] sm:$0xff]
    %v221 = vld [vmem:[#allocation3 + $0x58] sm:$0xff]
    %v222 = vld [vmem:[#allocation3 + $0x60] sm:$0xff]
    %v223 = vld [vmem:[#allocation3 + $0x68] sm:$0xff]
    %v224 = vld [vmem:[#allocation3 + $0x70] sm:$0xff]
    %v225 = vld [vmem:[#allocation3 + $0x78] sm:$0xff]
    %v226 = vld [vmem:[#allocation3 + $0x80] sm:$0xff]
    %v227 = vld [vmem:[#allocation3 + $0x88] sm:$0xff]
    %v228 = vld [vmem:[#allocation3 + $0x90] sm:$0xff]
    %v229 = vld [vmem:[#allocation3 + $0x98] sm:$0xff]
    %v230 = vld [vmem:[#allocation3 + $0xa0] sm:$0xff]
    %v231 = vld [vmem:[#allocation3 + $0xa8] sm:$0xff]
    %v232 = vld [vmem:[#allocation3 + $0xb0] sm:$0xff]
    %v233 = vld [vmem:[#allocation3 + $0xb8] sm:$0xff]
    %v234 = vld [vmem:[#allocation3 + $0xc0] sm:$0xff]
    %v235 = vld [vmem:[#allocation3 + $0xc8] sm:$0xff]
    %v236 = vld [vmem:[#allocation3 + $0xd0] sm:$0xff]
    %v237 = vld [vmem:[#allocation3 + $0xd8] sm:$0xff]
    %v238 = vld [vmem:[#allocation3 + $0xe0] sm:$0xff]
    %v239 = vld [vmem:[#allocation3 + $0xe8] sm:$0xff]
    %v240 = vld [vmem:[#allocation3 + $0xf0] sm:$0xff]
    %v241 = vld [vmem:[#allocation3 + $0xf8] sm:$0xff]
    %v242 = vmul.f32 %v81, %v81
    %v243 = vmul.f32 %v82, %v82
    %v244 = vmul.f32 %v83, %v83
    %v245 = vmul.f32 %v84, %v84
    %v246 = vmul.f32 %v85, %v85
    %v247 = vmul.f32 %v86, %v86
    %v248 = vmul.f32 %v87, %v87
    %v249 = vmul.f32 %v88, %v88
    %v250 = vmul.f32 %v89, %v89
    %v251 = vmul.f32 %v90, %v90
    %v252 = vmul.f32 %v91, %v91
    %v253 = vmul.f32 %v92, %v92
    %v254 = vmul.f32 %v93, %v93
    %v255 = vmul.f32 %v94, %v94
    %v256 = vmul.f32 %v95, %v95
    %v257 = vmul.f32 %v96, %v96
    %v258 = vmul.f32 %v97, %v97
    %v259 = vmul.f32 %v98, %v98
    %v260 = vmul.f32 %v99, %v99
    %v261 = vmul.f32 %v100, %v100
    %v262 = vmul.f32 %v101, %v101
    %v263 = vmul.f32 %v102, %v102
    %v264 = vmul.f32 %v103, %v103
    %v265 = vmul.f32 %v104, %v104
    %v266 = vmul.f32 %v105, %v105
    %v267 = vmul.f32 %v106, %v106
    %v268 = vmul.f32 %v107, %v107
    %v269 = vmul.f32 %v108, %v108
    %v270 = vmul.f32 %v109, %v109
    %v271 = vmul.f32 %v110, %v110
    %v272 = vmul.f32 %v111, %v111
    %v273 = vmul.f32 %v112, %v112
    %v274 = vadd.f32 %v210, %v242
    %v275 = vadd.f32 %v211, %v243
    %v276 = vadd.f32 %v212, %v244
    %v277 = vadd.f32 %v213, %v245
    %v278 = vadd.f32 %v214, %v246
    %v279 = vadd.f32 %v215, %v247
    %v280 = vadd.f32 %v216, %v248
    %v281 = vadd.f32 %v217, %v249
    %v282 = vadd.f32 %v218, %v250
    %v283 = vadd.f32 %v219, %v251
    %v284 = vadd.f32 %v220, %v252
    %v285 = vadd.f32 %v221, %v253
    %v286 = vadd.f32 %v222, %v254
    %v287 = vadd.f32 %v223, %v255
    %v288 = vadd.f32 %v224, %v256
    %v289 = vadd.f32 %v225, %v257
    %v290 = vadd.f32 %v226, %v258
    %v291 = vadd.f32 %v227, %v259
    %v292 = vadd.f32 %v228, %v260
    %v293 = vadd.f32 %v229, %v261
    %v294 = vadd.f32 %v230, %v262
    %v295 = vadd.f32 %v231, %v263
    %v296 = vadd.f32 %v232, %v264
    %v297 = vadd.f32 %v233, %v265
    %v298 = vadd.f32 %v234, %v266
    %v299 = vadd.f32 %v235, %v267
    %v300 = vadd.f32 %v236, %v268
    %v301 = vadd.f32 %v237, %v269
    %v302 = vadd.f32 %v238, %v270
    %v303 = vadd.f32 %v239, %v271
    %v304 = vadd.f32 %v240, %v272
    %v305 = vadd.f32 %v241, %v273
    %306 = vst.msk [vmem:[#allocation3] sm:$0xff] %vm177, %v274
    %307 = vst.msk [vmem:[#allocation3 + $0x8] sm:$0xff] %vm177, %v275
    %308 = vst.msk [vmem:[#allocation3 + $0x10] sm:$0xff] %vm177, %v276
    %309 = vst.msk [vmem:[#allocation3 + $0x18] sm:$0xff] %vm177, %v277
    %310 = vst.msk [vmem:[#allocation3 + $0x20] sm:$0xff] %vm177, %v278
    %311 = vst.msk [vmem:[#allocation3 + $0x28] sm:$0xff] %vm177, %v279
    %312 = vst.msk [vmem:[#allocation3 + $0x30] sm:$0xff] %vm177, %v280
    %313 = vst.msk [vmem:[#allocation3 + $0x38] sm:$0xff] %vm177, %v281
    %314 = vst.msk [vmem:[#allocation3 + $0x40] sm:$0xff] %vm177, %v282
    %315 = vst.msk [vmem:[#allocation3 + $0x48] sm:$0xff] %vm177, %v283
    %316 = vst.msk [vmem:[#allocation3 + $0x50] sm:$0xff] %vm177, %v284
    %317 = vst.msk [vmem:[#allocation3 + $0x58] sm:$0xff] %vm177, %v285
    %318 = vst.msk [vmem:[#allocation3 + $0x60] sm:$0xff] %vm177, %v286
    %319 = vst.msk [vmem:[#allocation3 + $0x68] sm:$0xff] %vm177, %v287
    %320 = vst.msk [vmem:[#allocation3 + $0x70] sm:$0xff] %vm177, %v288
    %321 = vst.msk [vmem:[#allocation3 + $0x78] sm:$0xff] %vm177, %v289
    %322 = vst.msk [vmem:[#allocation3 + $0x80] sm:$0xff] %vm177, %v290
    %323 = vst.msk [vmem:[#allocation3 + $0x88] sm:$0xff] %vm177, %v291
    %324 = vst.msk [vmem:[#allocation3 + $0x90] sm:$0xff] %vm177, %v292
    %325 = vst.msk [vmem:[#allocation3 + $0x98] sm:$0xff] %vm177, %v293
    %326 = vst.msk [vmem:[#allocation3 + $0xa0] sm:$0xff] %vm177, %v294
    %327 = vst.msk [vmem:[#allocation3 + $0xa8] sm:$0xff] %vm177, %v295
    %328 = vst.msk [vmem:[#allocation3 + $0xb0] sm:$0xff] %vm177, %v296
    %329 = vst.msk [vmem:[#allocation3 + $0xb8] sm:$0xff] %vm177, %v297
    %330 = vst.msk [vmem:[#allocation3 + $0xc0] sm:$0xff] %vm177, %v298
    %331 = vst.msk [vmem:[#allocation3 + $0xc8] sm:$0xff] %vm177, %v299
    %332 = vst.msk [vmem:[#allocation3 + $0xd0] sm:$0xff] %vm177, %v300
    %333 = vst.msk [vmem:[#allocation3 + $0xd8] sm:$0xff] %vm177, %v301
    %334 = vst.msk [vmem:[#allocation3 + $0xe0] sm:$0xff] %vm177, %v302
    %335 = vst.msk [vmem:[#allocation3 + $0xe8] sm:$0xff] %vm177, %v303
    %336 = vst.msk [vmem:[#allocation3 + $0xf0] sm:$0xff] %vm177, %v304
    %337 = vst.msk [vmem:[#allocation3 + $0xf8] sm:$0xff] %vm177, %v305
    // Predicated region
    $region10: #{tpu_custom_call.1} parent=1 // pred_check
      %p338 = pneg %p12
    $region11: #{tpu_custom_call.1} parent=1 // pred_check_branch
      %340 = sbr.rel (%p338) target = $region13
    $region12: #{tpu_custom_call.1} parent=1 // pred_region
      %v341 = vld [vmem:[#allocation2] sm:$0xff]
      %v342 = vld [vmem:[#allocation2 + $0x8] sm:$0xff]
      %v343 = vld [vmem:[#allocation2 + $0x10] sm:$0xff]
      %v344 = vld [vmem:[#allocation2 + $0x18] sm:$0xff]
      %v345 = vld [vmem:[#allocation2 + $0x20] sm:$0xff]
      %v346 = vld [vmem:[#allocation2 + $0x28] sm:$0xff]
      %v347 = vld [vmem:[#allocation2 + $0x30] sm:$0xff]
      %v348 = vld [vmem:[#allocation2 + $0x38] sm:$0xff]
      %v349 = vld [vmem:[#allocation2 + $0x40] sm:$0xff]
      %v350 = vld [vmem:[#allocation2 + $0x48] sm:$0xff]
      %v351 = vld [vmem:[#allocation2 + $0x50] sm:$0xff]
      %v352 = vld [vmem:[#allocation2 + $0x58] sm:$0xff]
      %v353 = vld [vmem:[#allocation2 + $0x60] sm:$0xff]
      %v354 = vld [vmem:[#allocation2 + $0x68] sm:$0xff]
      %v355 = vld [vmem:[#allocation2 + $0x70] sm:$0xff]
      %v356 = vld [vmem:[#allocation2 + $0x78] sm:$0xff]
      %v357 = vld [vmem:[#allocation2 + $0x80] sm:$0xff]
      %v358 = vld [vmem:[#allocation2 + $0x88] sm:$0xff]
      %v359 = vld [vmem:[#allocation2 + $0x90] sm:$0xff]
      %v360 = vld [vmem:[#allocation2 + $0x98] sm:$0xff]
      %v361 = vld [vmem:[#allocation2 + $0xa0] sm:$0xff]
      %v362 = vld [vmem:[#allocation2 + $0xa8] sm:$0xff]
      %v363 = vld [vmem:[#allocation2 + $0xb0] sm:$0xff]
      %v364 = vld [vmem:[#allocation2 + $0xb8] sm:$0xff]
      %v365 = vld [vmem:[#allocation2 + $0xc0] sm:$0xff]
      %v366 = vld [vmem:[#allocation2 + $0xc8] sm:$0xff]
      %v367 = vld [vmem:[#allocation2 + $0xd0] sm:$0xff]
      %v368 = vld [vmem:[#allocation2 + $0xd8] sm:$0xff]
      %v369 = vld [vmem:[#allocation2 + $0xe0] sm:$0xff]
      %v370 = vld [vmem:[#allocation2 + $0xe8] sm:$0xff]
      %v371 = vld [vmem:[#allocation2 + $0xf0] sm:$0xff]
      %v372 = vld [vmem:[#allocation2 + $0xf8] sm:$0xff]
      %v373 = vsel %vm177, %v341, 0.0
      %374 = vadd.xlane.f32.xlu0 %v373
      %v375 = vpop.xlane.xlu0 %374
      %v376 = vsel %vm177, %v342, 0.0
      %377 = vadd.xlane.f32.xlu0 %v376
      %v378 = vpop.xlane.xlu0 %377
      %v379 = vsel %vm177, %v343, 0.0
      %380 = vadd.xlane.f32.xlu0 %v379
      %v381 = vpop.xlane.xlu0 %380
      %v382 = vsel %vm177, %v344, 0.0
      %383 = vadd.xlane.f32.xlu0 %v382
      %v384 = vpop.xlane.xlu0 %383
      %v385 = vsel %vm177, %v345, 0.0
      %386 = vadd.xlane.f32.xlu0 %v385
      %v387 = vpop.xlane.xlu0 %386
      %v388 = vsel %vm177, %v346, 0.0
      %389 = vadd.xlane.f32.xlu0 %v388
      %v390 = vpop.xlane.xlu0 %389
      %v391 = vsel %vm177, %v347, 0.0
      %392 = vadd.xlane.f32.xlu0 %v391
      %v393 = vpop.xlane.xlu0 %392
      %v394 = vsel %vm177, %v348, 0.0
      %395 = vadd.xlane.f32.xlu0 %v394
      %v396 = vpop.xlane.xlu0 %395
      %v397 = vsel %vm177, %v349, 0.0
      %398 = vadd.xlane.f32.xlu0 %v397
      %v399 = vpop.xlane.xlu0 %398
      %v400 = vsel %vm177, %v350, 0.0
      %401 = vadd.xlane.f32.xlu0 %v400
      %v402 = vpop.xlane.xlu0 %401
      %v403 = vsel %vm177, %v351, 0.0
      %404 = vadd.xlane.f32.xlu0 %v403
      %v405 = vpop.xlane.xlu0 %404
      %v406 = vsel %vm177, %v352, 0.0
      %407 = vadd.xlane.f32.xlu0 %v406
      %v408 = vpop.xlane.xlu0 %407
      %v409 = vsel %vm177, %v353, 0.0
      %410 = vadd.xlane.f32.xlu0 %v409
      %v411 = vpop.xlane.xlu0 %410
      %v412 = vsel %vm177, %v354, 0.0
      %413 = vadd.xlane.f32.xlu0 %v412
      %v414 = vpop.xlane.xlu0 %413
      %v415 = vsel %vm177, %v355, 0.0
      %416 = vadd.xlane.f32.xlu0 %v415
      %v417 = vpop.xlane.xlu0 %416
      %v418 = vsel %vm177, %v356, 0.0
      %419 = vadd.xlane.f32.xlu0 %v418
      %v420 = vpop.xlane.xlu0 %419
      %v421 = vsel %vm177, %v357, 0.0
      %422 = vadd.xlane.f32.xlu0 %v421
      %v423 = vpop.xlane.xlu0 %422
      %v424 = vsel %vm177, %v358, 0.0
      %425 = vadd.xlane.f32.xlu0 %v424
      %v426 = vpop.xlane.xlu0 %425
      %v427 = vsel %vm177, %v359, 0.0
      %428 = vadd.xlane.f32.xlu0 %v427
      %v429 = vpop.xlane.xlu0 %428
      %v430 = vsel %vm177, %v360, 0.0
      %431 = vadd.xlane.f32.xlu0 %v430
      %v432 = vpop.xlane.xlu0 %431
      %v433 = vsel %vm177, %v361, 0.0
      %434 = vadd.xlane.f32.xlu0 %v433
      %v435 = vpop.xlane.xlu0 %434
      %v436 = vsel %vm177, %v362, 0.0
      %437 = vadd.xlane.f32.xlu0 %v436
      %v438 = vpop.xlane.xlu0 %437
      %v439 = vsel %vm177, %v363, 0.0
      %440 = vadd.xlane.f32.xlu0 %v439
      %v441 = vpop.xlane.xlu0 %440
      %v442 = vsel %vm177, %v364, 0.0
      %443 = vadd.xlane.f32.xlu0 %v442
      %v444 = vpop.xlane.xlu0 %443
      %v445 = vsel %vm177, %v365, 0.0
      %446 = vadd.xlane.f32.xlu0 %v445
      %v447 = vpop.xlane.xlu0 %446
      %v448 = vsel %vm177, %v366, 0.0
      %449 = vadd.xlane.f32.xlu0 %v448
      %v450 = vpop.xlane.xlu0 %449
      %v451 = vsel %vm177, %v367, 0.0
      %452 = vadd.xlane.f32.xlu0 %v451
      %v453 = vpop.xlane.xlu0 %452
      %v454 = vsel %vm177, %v368, 0.0
      %455 = vadd.xlane.f32.xlu0 %v454
      %v456 = vpop.xlane.xlu0 %455
      %v457 = vsel %vm177, %v369, 0.0
      %458 = vadd.xlane.f32.xlu0 %v457
      %v459 = vpop.xlane.xlu0 %458
      %v460 = vsel %vm177, %v370, 0.0
      %461 = vadd.xlane.f32.xlu0 %v460
      %v462 = vpop.xlane.xlu0 %461
      %v463 = vsel %vm177, %v371, 0.0
      %464 = vadd.xlane.f32.xlu0 %v463
      %v465 = vpop.xlane.xlu0 %464
      %v466 = vsel %vm177, %v372, 0.0
      %467 = vadd.xlane.f32.xlu0 %v466
      %v468 = vpop.xlane.xlu0 %467
      %v469 = vld [vmem:[#allocation3] sm:$0xff]
      %v470 = vld [vmem:[#allocation3 + $0x8] sm:$0xff]
      %v471 = vld [vmem:[#allocation3 + $0x10] sm:$0xff]
      %v472 = vld [vmem:[#allocation3 + $0x18] sm:$0xff]
      %v473 = vld [vmem:[#allocation3 + $0x20] sm:$0xff]
      %v474 = vld [vmem:[#allocation3 + $0x28] sm:$0xff]
      %v475 = vld [vmem:[#allocation3 + $0x30] sm:$0xff]
      %v476 = vld [vmem:[#allocation3 + $0x38] sm:$0xff]
      %v477 = vld [vmem:[#allocation3 + $0x40] sm:$0xff]
      %v478 = vld [vmem:[#allocation3 + $0x48] sm:$0xff]
      %v479 = vld [vmem:[#allocation3 + $0x50] sm:$0xff]
      %v480 = vld [vmem:[#allocation3 + $0x58] sm:$0xff]
      %v481 = vld [vmem:[#allocation3 + $0x60] sm:$0xff]
      %v482 = vld [vmem:[#allocation3 + $0x68] sm:$0xff]
      %v483 = vld [vmem:[#allocation3 + $0x70] sm:$0xff]
      %v484 = vld [vmem:[#allocation3 + $0x78] sm:$0xff]
      %v485 = vld [vmem:[#allocation3 + $0x80] sm:$0xff]
      %v486 = vld [vmem:[#allocation3 + $0x88] sm:$0xff]
      %v487 = vld [vmem:[#allocation3 + $0x90] sm:$0xff]
      %v488 = vld [vmem:[#allocation3 + $0x98] sm:$0xff]
      %v489 = vld [vmem:[#allocation3 + $0xa0] sm:$0xff]
      %v490 = vld [vmem:[#allocation3 + $0xa8] sm:$0xff]
      %v491 = vld [vmem:[#allocation3 + $0xb0] sm:$0xff]
      %v492 = vld [vmem:[#allocation3 + $0xb8] sm:$0xff]
      %v493 = vld [vmem:[#allocation3 + $0xc0] sm:$0xff]
      %v494 = vld [vmem:[#allocation3 + $0xc8] sm:$0xff]
      %v495 = vld [vmem:[#allocation3 + $0xd0] sm:$0xff]
      %v496 = vld [vmem:[#allocation3 + $0xd8] sm:$0xff]
      %v497 = vld [vmem:[#allocation3 + $0xe0] sm:$0xff]
      %v498 = vld [vmem:[#allocation3 + $0xe8] sm:$0xff]
      %v499 = vld [vmem:[#allocation3 + $0xf0] sm:$0xff]
      %v500 = vld [vmem:[#allocation3 + $0xf8] sm:$0xff]
      %v501 = vsel %vm177, %v469, 0.0
      %502 = vadd.xlane.f32.xlu0 %v501
      %v503 = vpop.xlane.xlu0 %502
      %v504 = vsel %vm177, %v470, 0.0
      %505 = vadd.xlane.f32.xlu0 %v504
      %v506 = vpop.xlane.xlu0 %505
      %v507 = vsel %vm177, %v471, 0.0
      %508 = vadd.xlane.f32.xlu0 %v507
      %v509 = vpop.xlane.xlu0 %508
      %v510 = vsel %vm177, %v472, 0.0
      %511 = vadd.xlane.f32.xlu0 %v510
      %v512 = vpop.xlane.xlu0 %511
      %v513 = vsel %vm177, %v473, 0.0
      %514 = vadd.xlane.f32.xlu0 %v513
      %v515 = vpop.xlane.xlu0 %514
      %v516 = vsel %vm177, %v474, 0.0
      %517 = vadd.xlane.f32.xlu0 %v516
      %v518 = vpop.xlane.xlu0 %517
      %v519 = vsel %vm177, %v475, 0.0
      %520 = vadd.xlane.f32.xlu0 %v519
      %v521 = vpop.xlane.xlu0 %520
      %v522 = vsel %vm177, %v476, 0.0
      %523 = vadd.xlane.f32.xlu0 %v522
      %v524 = vpop.xlane.xlu0 %523
      %v525 = vsel %vm177, %v477, 0.0
      %526 = vadd.xlane.f32.xlu0 %v525
      %v527 = vpop.xlane.xlu0 %526
      %v528 = vsel %vm177, %v478, 0.0
      %529 = vadd.xlane.f32.xlu0 %v528
      %v530 = vpop.xlane.xlu0 %529
      %v531 = vsel %vm177, %v479, 0.0
      %532 = vadd.xlane.f32.xlu0 %v531
      %v533 = vpop.xlane.xlu0 %532
      %v534 = vsel %vm177, %v480, 0.0
      %535 = vadd.xlane.f32.xlu0 %v534
      %v536 = vpop.xlane.xlu0 %535
      %v537 = vsel %vm177, %v481, 0.0
      %538 = vadd.xlane.f32.xlu0 %v537
      %v539 = vpop.xlane.xlu0 %538
      %v540 = vsel %vm177, %v482, 0.0
      %541 = vadd.xlane.f32.xlu0 %v540
      %v542 = vpop.xlane.xlu0 %541
      %v543 = vsel %vm177, %v483, 0.0
      %544 = vadd.xlane.f32.xlu0 %v543
      %v545 = vpop.xlane.xlu0 %544
      %v546 = vsel %vm177, %v484, 0.0
      %547 = vadd.xlane.f32.xlu0 %v546
      %v548 = vpop.xlane.xlu0 %547
      %v549 = vsel %vm177, %v485, 0.0
      %550 = vadd.xlane.f32.xlu0 %v549
      %v551 = vpop.xlane.xlu0 %550
      %v552 = vsel %vm177, %v486, 0.0
      %553 = vadd.xlane.f32.xlu0 %v552
      %v554 = vpop.xlane.xlu0 %553
      %v555 = vsel %vm177, %v487, 0.0
      %556 = vadd.xlane.f32.xlu0 %v555
      %v557 = vpop.xlane.xlu0 %556
      %v558 = vsel %vm177, %v488, 0.0
      %559 = vadd.xlane.f32.xlu0 %v558
      %v560 = vpop.xlane.xlu0 %559
      %v561 = vsel %vm177, %v489, 0.0
      %562 = vadd.xlane.f32.xlu0 %v561
      %v563 = vpop.xlane.xlu0 %562
      %v564 = vsel %vm177, %v490, 0.0
      %565 = vadd.xlane.f32.xlu0 %v564
      %v566 = vpop.xlane.xlu0 %565
      %v567 = vsel %vm177, %v491, 0.0
      %568 = vadd.xlane.f32.xlu0 %v567
      %v569 = vpop.xlane.xlu0 %568
      %v570 = vsel %vm177, %v492, 0.0
      %571 = vadd.xlane.f32.xlu0 %v570
      %v572 = vpop.xlane.xlu0 %571
      %v573 = vsel %vm177, %v493, 0.0
      %574 = vadd.xlane.f32.xlu0 %v573
      %v575 = vpop.xlane.xlu0 %574
      %v576 = vsel %vm177, %v494, 0.0
      %577 = vadd.xlane.f32.xlu0 %v576
      %v578 = vpop.xlane.xlu0 %577
      %v579 = vsel %vm177, %v495, 0.0
      %580 = vadd.xlane.f32.xlu0 %v579
      %v581 = vpop.xlane.xlu0 %580
      %v582 = vsel %vm177, %v496, 0.0
      %583 = vadd.xlane.f32.xlu0 %v582
      %v584 = vpop.xlane.xlu0 %583
      %v585 = vsel %vm177, %v497, 0.0
      %586 = vadd.xlane.f32.xlu0 %v585
      %v587 = vpop.xlane.xlu0 %586
      %v588 = vsel %vm177, %v498, 0.0
      %589 = vadd.xlane.f32.xlu0 %v588
      %v590 = vpop.xlane.xlu0 %589
      %v591 = vsel %vm177, %v499, 0.0
      %592 = vadd.xlane.f32.xlu0 %v591
      %v593 = vpop.xlane.xlu0 %592
      %v594 = vsel %vm177, %v500, 0.0
      %595 = vadd.xlane.f32.xlu0 %v594
      %v596 = vpop.xlane.xlu0 %595
      %v597 = vmul.f32 %v375, 0.0625
      %v598 = vmul.f32 %v378, 0.0625
      %v599 = vmul.f32 %v381, 0.0625
      %v600 = vmul.f32 %v384, 0.0625
      %v601 = vmul.f32 %v387, 0.0625
      %v602 = vmul.f32 %v390, 0.0625
      %v603 = vmul.f32 %v393, 0.0625
      %v604 = vmul.f32 %v396, 0.0625
      %v605 = vmul.f32 %v399, 0.0625
      %v606 = vmul.f32 %v402, 0.0625
      %v607 = vmul.f32 %v405, 0.0625
      %v608 = vmul.f32 %v408, 0.0625
      %v609 = vmul.f32 %v411, 0.0625
      %v610 = vmul.f32 %v414, 0.0625
      %v611 = vmul.f32 %v417, 0.0625
      %v612 = vmul.f32 %v420, 0.0625
      %v613 = vmul.f32 %v423, 0.0625
      %v614 = vmul.f32 %v426, 0.0625
      %v615 = vmul.f32 %v429, 0.0625
      %v616 = vmul.f32 %v432, 0.0625
      %v617 = vmul.f32 %v435, 0.0625
      %v618 = vmul.f32 %v438, 0.0625
      %v619 = vmul.f32 %v441, 0.0625
      %v620 = vmul.f32 %v444, 0.0625
      %v621 = vmul.f32 %v447, 0.0625
      %v622 = vmul.f32 %v450, 0.0625
      %v623 = vmul.f32 %v453, 0.0625
      %v624 = vmul.f32 %v456, 0.0625
      %v625 = vmul.f32 %v459, 0.0625
      %v626 = vmul.f32 %v462, 0.0625
      %v627 = vmul.f32 %v465, 0.0625
      %v628 = vmul.f32 %v468, 0.0625
      %v629 = vmul.f32 %v503, 0.0625
      %v630 = vmul.f32 %v506, 0.0625
      %v631 = vmul.f32 %v509, 0.0625
      %v632 = vmul.f32 %v512, 0.0625
      %v633 = vmul.f32 %v515, 0.0625
      %v634 = vmul.f32 %v518, 0.0625
      %v635 = vmul.f32 %v521, 0.0625
      %v636 = vmul.f32 %v524, 0.0625
      %v637 = vmul.f32 %v527, 0.0625
      %v638 = vmul.f32 %v530, 0.0625
      %v639 = vmul.f32 %v533, 0.0625
      %v640 = vmul.f32 %v536, 0.0625
      %v641 = vmul.f32 %v539, 0.0625
      %v642 = vmul.f32 %v542, 0.0625
      %v643 = vmul.f32 %v545, 0.0625
      %v644 = vmul.f32 %v548, 0.0625
      %v645 = vmul.f32 %v551, 0.0625
      %v646 = vmul.f32 %v554, 0.0625
      %v647 = vmul.f32 %v557, 0.0625
      %v648 = vmul.f32 %v560, 0.0625
      %v649 = vmul.f32 %v563, 0.0625
      %v650 = vmul.f32 %v566, 0.0625
      %v651 = vmul.f32 %v569, 0.0625
      %v652 = vmul.f32 %v572, 0.0625
      %v653 = vmul.f32 %v575, 0.0625
      %v654 = vmul.f32 %v578, 0.0625
      %v655 = vmul.f32 %v581, 0.0625
      %v656 = vmul.f32 %v584, 0.0625
      %v657 = vmul.f32 %v587, 0.0625
      %v658 = vmul.f32 %v590, 0.0625
      %v659 = vmul.f32 %v593, 0.0625
      %v660 = vmul.f32 %v596, 0.0625
      %v661 = vmul.f32 %v597, %v597
      %v662 = vmul.f32 %v598, %v598
      %v663 = vmul.f32 %v599, %v599
      %v664 = vmul.f32 %v600, %v600
      %v665 = vmul.f32 %v601, %v601
      %v666 = vmul.f32 %v602, %v602
      %v667 = vmul.f32 %v603, %v603
      %v668 = vmul.f32 %v604, %v604
      %v669 = vmul.f32 %v605, %v605
      %v670 = vmul.f32 %v606, %v606
      %v671 = vmul.f32 %v607, %v607
      %v672 = vmul.f32 %v608, %v608
      %v673 = vmul.f32 %v609, %v609
      %v674 = vmul.f32 %v610, %v610
      %v675 = vmul.f32 %v611, %v611
      %v676 = vmul.f32 %v612, %v612
      %v677 = vmul.f32 %v613, %v613
      %v678 = vmul.f32 %v614, %v614
      %v679 = vmul.f32 %v615, %v615
      %v680 = vmul.f32 %v616, %v616
      %v681 = vmul.f32 %v617, %v617
      %v682 = vmul.f32 %v618, %v618
      %v683 = vmul.f32 %v619, %v619
      %v684 = vmul.f32 %v620, %v620
      %v685 = vmul.f32 %v621, %v621
      %v686 = vmul.f32 %v622, %v622
      %v687 = vmul.f32 %v623, %v623
      %v688 = vmul.f32 %v624, %v624
      %v689 = vmul.f32 %v625, %v625
      %v690 = vmul.f32 %v626, %v626
      %v691 = vmul.f32 %v627, %v627
      %v692 = vmul.f32 %v628, %v628
      %v693 = vsub.f32 %v629, %v661
      %v694 = vsub.f32 %v630, %v662
      %v695 = vsub.f32 %v631, %v663
      %v696 = vsub.f32 %v632, %v664
      %v697 = vsub.f32 %v633, %v665
      %v698 = vsub.f32 %v634, %v666
      %v699 = vsub.f32 %v635, %v667
      %v700 = vsub.f32 %v636, %v668
      %v701 = vsub.f32 %v637, %v669
      %v702 = vsub.f32 %v638, %v670
      %v703 = vsub.f32 %v639, %v671
      %v704 = vsub.f32 %v640, %v672
      %v705 = vsub.f32 %v641, %v673
      %v706 = vsub.f32 %v642, %v674
      %v707 = vsub.f32 %v643, %v675
      %v708 = vsub.f32 %v644, %v676
      %v709 = vsub.f32 %v645, %v677
      %v710 = vsub.f32 %v646, %v678
      %v711 = vsub.f32 %v647, %v679
      %v712 = vsub.f32 %v648, %v680
      %v713 = vsub.f32 %v649, %v681
      %v714 = vsub.f32 %v650, %v682
      %v715 = vsub.f32 %v651, %v683
      %v716 = vsub.f32 %v652, %v684
      %v717 = vsub.f32 %v653, %v685
      %v718 = vsub.f32 %v654, %v686
      %v719 = vsub.f32 %v655, %v687
      %v720 = vsub.f32 %v656, %v688
      %v721 = vsub.f32 %v657, %v689
      %v722 = vsub.f32 %v658, %v690
      %v723 = vsub.f32 %v659, %v691
      %v724 = vsub.f32 %v660, %v692
      %v725 = vmax.f32 %v693, 1e-12
      %v726 = vmax.f32 %v694, 1e-12
      %v727 = vmax.f32 %v695, 1e-12
      %v728 = vmax.f32 %v696, 1e-12
      %v729 = vmax.f32 %v697, 1e-12
      %v730 = vmax.f32 %v698, 1e-12
      %v731 = vmax.f32 %v699, 1e-12
      %v732 = vmax.f32 %v700, 1e-12
      %v733 = vmax.f32 %v701, 1e-12
      %v734 = vmax.f32 %v702, 1e-12
      %v735 = vmax.f32 %v703, 1e-12
      %v736 = vmax.f32 %v704, 1e-12
      %v737 = vmax.f32 %v705, 1e-12
      %v738 = vmax.f32 %v706, 1e-12
      %v739 = vmax.f32 %v707, 1e-12
      %v740 = vmax.f32 %v708, 1e-12
      %v741 = vmax.f32 %v709, 1e-12
      %v742 = vmax.f32 %v710, 1e-12
      %v743 = vmax.f32 %v711, 1e-12
      %v744 = vmax.f32 %v712, 1e-12
      %v745 = vmax.f32 %v713, 1e-12
      %v746 = vmax.f32 %v714, 1e-12
      %v747 = vmax.f32 %v715, 1e-12
      %v748 = vmax.f32 %v716, 1e-12
      %v749 = vmax.f32 %v717, 1e-12
      %v750 = vmax.f32 %v718, 1e-12
      %v751 = vmax.f32 %v719, 1e-12
      %v752 = vmax.f32 %v720, 1e-12
      %v753 = vmax.f32 %v721, 1e-12
      %v754 = vmax.f32 %v722, 1e-12
      %v755 = vmax.f32 %v723, 1e-12
      %v756 = vmax.f32 %v724, 1e-12
      %v757 = vrsqrt.pop %v725
      %v758 = vmul.f32 %v725, %v757
      %vm759 = vcmp.eq.f32.partialorder %v725, inf
      %v760 = vsel %vm759, %v725, %v758
      %vm761 = vcmp.eq.f32.partialorder %v725, 0.0
      %v762 = vand.u32 %v725, 2147483648
      %v763 = vsel %vm761, %v762, %v760
      %v764 = vrsqrt.pop %v726
      %v765 = vmul.f32 %v726, %v764
      %vm766 = vcmp.eq.f32.partialorder %v726, inf
      %v767 = vsel %vm766, %v726, %v765
      %vm768 = vcmp.eq.f32.partialorder %v726, 0.0
      %v769 = vand.u32 %v726, 2147483648
      %v770 = vsel %vm768, %v769, %v767
      %v771 = vrsqrt.pop %v727
      %v772 = vmul.f32 %v727, %v771
      %vm773 = vcmp.eq.f32.partialorder %v727, inf
      %v774 = vsel %vm773, %v727, %v772
      %vm775 = vcmp.eq.f32.partialorder %v727, 0.0
      %v776 = vand.u32 %v727, 2147483648
      %v777 = vsel %vm775, %v776, %v774
      %v778 = vrsqrt.pop %v728
      %v779 = vmul.f32 %v728, %v778
      %vm780 = vcmp.eq.f32.partialorder %v728, inf
      %v781 = vsel %vm780, %v728, %v779
      %vm782 = vcmp.eq.f32.partialorder %v728, 0.0
      %v783 = vand.u32 %v728, 2147483648
      %v784 = vsel %vm782, %v783, %v781
      %v785 = vrsqrt.pop %v729
      %v786 = vmul.f32 %v729, %v785
      %vm787 = vcmp.eq.f32.partialorder %v729, inf
      %v788 = vsel %vm787, %v729, %v786
      %vm789 = vcmp.eq.f32.partialorder %v729, 0.0
      %v790 = vand.u32 %v729, 2147483648
      %v791 = vsel %vm789, %v790, %v788
      %v792 = vrsqrt.pop %v730
      %v793 = vmul.f32 %v730, %v792
      %vm794 = vcmp.eq.f32.partialorder %v730, inf
      %v795 = vsel %vm794, %v730, %v793
      %vm796 = vcmp.eq.f32.partialorder %v730, 0.0
      %v797 = vand.u32 %v730, 2147483648
      %v798 = vsel %vm796, %v797, %v795
      %v799 = vrsqrt.pop %v731
      %v800 = vmul.f32 %v731, %v799
      %vm801 = vcmp.eq.f32.partialorder %v731, inf
      %v802 = vsel %vm801, %v731, %v800
      %vm803 = vcmp.eq.f32.partialorder %v731, 0.0
      %v804 = vand.u32 %v731, 2147483648
      %v805 = vsel %vm803, %v804, %v802
      %v806 = vrsqrt.pop %v732
      %v807 = vmul.f32 %v732, %v806
      %vm808 = vcmp.eq.f32.partialorder %v732, inf
      %v809 = vsel %vm808, %v732, %v807
      %vm810 = vcmp.eq.f32.partialorder %v732, 0.0
      %v811 = vand.u32 %v732, 2147483648
      %v812 = vsel %vm810, %v811, %v809
      %v813 = vrsqrt.pop %v733
      %v814 = vmul.f32 %v733, %v813
      %vm815 = vcmp.eq.f32.partialorder %v733, inf
      %v816 = vsel %vm815, %v733, %v814
      %vm817 = vcmp.eq.f32.partialorder %v733, 0.0
      %v818 = vand.u32 %v733, 2147483648
      %v819 = vsel %vm817, %v818, %v816
      %v820 = vrsqrt.pop %v734
      %v821 = vmul.f32 %v734, %v820
      %vm822 = vcmp.eq.f32.partialorder %v734, inf
      %v823 = vsel %vm822, %v734, %v821
      %vm824 = vcmp.eq.f32.partialorder %v734, 0.0
      %v825 = vand.u32 %v734, 2147483648
      %v826 = vsel %vm824, %v825, %v823
      %v827 = vrsqrt.pop %v735
      %v828 = vmul.f32 %v735, %v827
      %vm829 = vcmp.eq.f32.partialorder %v735, inf
      %v830 = vsel %vm829, %v735, %v828
      %vm831 = vcmp.eq.f32.partialorder %v735, 0.0
      %v832 = vand.u32 %v735, 2147483648
      %v833 = vsel %vm831, %v832, %v830
      %v834 = vrsqrt.pop %v736
      %v835 = vmul.f32 %v736, %v834
      %vm836 = vcmp.eq.f32.partialorder %v736, inf
      %v837 = vsel %vm836, %v736, %v835
      %vm838 = vcmp.eq.f32.partialorder %v736, 0.0
      %v839 = vand.u32 %v736, 2147483648
      %v840 = vsel %vm838, %v839, %v837
      %v841 = vrsqrt.pop %v737
      %v842 = vmul.f32 %v737, %v841
      %vm843 = vcmp.eq.f32.partialorder %v737, inf
      %v844 = vsel %vm843, %v737, %v842
      %vm845 = vcmp.eq.f32.partialorder %v737, 0.0
      %v846 = vand.u32 %v737, 2147483648
      %v847 = vsel %vm845, %v846, %v844
      %v848 = vrsqrt.pop %v738
      %v849 = vmul.f32 %v738, %v848
      %vm850 = vcmp.eq.f32.partialorder %v738, inf
      %v851 = vsel %vm850, %v738, %v849
      %vm852 = vcmp.eq.f32.partialorder %v738, 0.0
      %v853 = vand.u32 %v738, 2147483648
      %v854 = vsel %vm852, %v853, %v851
      %v855 = vrsqrt.pop %v739
      %v856 = vmul.f32 %v739, %v855
      %vm857 = vcmp.eq.f32.partialorder %v739, inf
      %v858 = vsel %vm857, %v739, %v856
      %vm859 = vcmp.eq.f32.partialorder %v739, 0.0
      %v860 = vand.u32 %v739, 2147483648
      %v861 = vsel %vm859, %v860, %v858
      %v862 = vrsqrt.pop %v740
      %v863 = vmul.f32 %v740, %v862
      %vm864 = vcmp.eq.f32.partialorder %v740, inf
      %v865 = vsel %vm864, %v740, %v863
      %vm866 = vcmp.eq.f32.partialorder %v740, 0.0
      %v867 = vand.u32 %v740, 2147483648
      %v868 = vsel %vm866, %v867, %v865
      %v869 = vrsqrt.pop %v741
      %v870 = vmul.f32 %v741, %v869
      %vm871 = vcmp.eq.f32.partialorder %v741, inf
      %v872 = vsel %vm871, %v741, %v870
      %vm873 = vcmp.eq.f32.partialorder %v741, 0.0
      %v874 = vand.u32 %v741, 2147483648
      %v875 = vsel %vm873, %v874, %v872
      %v876 = vrsqrt.pop %v742
      %v877 = vmul.f32 %v742, %v876
      %vm878 = vcmp.eq.f32.partialorder %v742, inf
      %v879 = vsel %vm878, %v742, %v877
      %vm880 = vcmp.eq.f32.partialorder %v742, 0.0
      %v881 = vand.u32 %v742, 2147483648
      %v882 = vsel %vm880, %v881, %v879
      %v883 = vrsqrt.pop %v743
      %v884 = vmul.f32 %v743, %v883
      %vm885 = vcmp.eq.f32.partialorder %v743, inf
      %v886 = vsel %vm885, %v743, %v884
      %vm887 = vcmp.eq.f32.partialorder %v743, 0.0
      %v888 = vand.u32 %v743, 2147483648
      %v889 = vsel %vm887, %v888, %v886
      %v890 = vrsqrt.pop %v744
      %v891 = vmul.f32 %v744, %v890
      %vm892 = vcmp.eq.f32.partialorder %v744, inf
      %v893 = vsel %vm892, %v744, %v891
      %vm894 = vcmp.eq.f32.partialorder %v744, 0.0
      %v895 = vand.u32 %v744, 2147483648
      %v896 = vsel %vm894, %v895, %v893
      %v897 = vrsqrt.pop %v745
      %v898 = vmul.f32 %v745, %v897
      %vm899 = vcmp.eq.f32.partialorder %v745, inf
      %v900 = vsel %vm899, %v745, %v898
      %vm901 = vcmp.eq.f32.partialorder %v745, 0.0
      %v902 = vand.u32 %v745, 2147483648
      %v903 = vsel %vm901, %v902, %v900
      %v904 = vrsqrt.pop %v746
      %v905 = vmul.f32 %v746, %v904
      %vm906 = vcmp.eq.f32.partialorder %v746, inf
      %v907 = vsel %vm906, %v746, %v905
      %vm908 = vcmp.eq.f32.partialorder %v746, 0.0
      %v909 = vand.u32 %v746, 2147483648
      %v910 = vsel %vm908, %v909, %v907
      %v911 = vrsqrt.pop %v747
      %v912 = vmul.f32 %v747, %v911
      %vm913 = vcmp.eq.f32.partialorder %v747, inf
      %v914 = vsel %vm913, %v747, %v912
      %vm915 = vcmp.eq.f32.partialorder %v747, 0.0
      %v916 = vand.u32 %v747, 2147483648
      %v917 = vsel %vm915, %v916, %v914
      %v918 = vrsqrt.pop %v748
      %v919 = vmul.f32 %v748, %v918
      %vm920 = vcmp.eq.f32.partialorder %v748, inf
      %v921 = vsel %vm920, %v748, %v919
      %vm922 = vcmp.eq.f32.partialorder %v748, 0.0
      %v923 = vand.u32 %v748, 2147483648
      %v924 = vsel %vm922, %v923, %v921
      %v925 = vrsqrt.pop %v749
      %v926 = vmul.f32 %v749, %v925
      %vm927 = vcmp.eq.f32.partialorder %v749, inf
      %v928 = vsel %vm927, %v749, %v926
      %vm929 = vcmp.eq.f32.partialorder %v749, 0.0
      %v930 = vand.u32 %v749, 2147483648
      %v931 = vsel %vm929, %v930, %v928
      %v932 = vrsqrt.pop %v750
      %v933 = vmul.f32 %v750, %v932
      %vm934 = vcmp.eq.f32.partialorder %v750, inf
      %v935 = vsel %vm934, %v750, %v933
      %vm936 = vcmp.eq.f32.partialorder %v750, 0.0
      %v937 = vand.u32 %v750, 2147483648
      %v938 = vsel %vm936, %v937, %v935
      %v939 = vrsqrt.pop %v751
      %v940 = vmul.f32 %v751, %v939
      %vm941 = vcmp.eq.f32.partialorder %v751, inf
      %v942 = vsel %vm941, %v751, %v940
      %vm943 = vcmp.eq.f32.partialorder %v751, 0.0
      %v944 = vand.u32 %v751, 2147483648
      %v945 = vsel %vm943, %v944, %v942
      %v946 = vrsqrt.pop %v752
      %v947 = vmul.f32 %v752, %v946
      %vm948 = vcmp.eq.f32.partialorder %v752, inf
      %v949 = vsel %vm948, %v752, %v947
      %vm950 = vcmp.eq.f32.partialorder %v752, 0.0
      %v951 = vand.u32 %v752, 2147483648
      %v952 = vsel %vm950, %v951, %v949
      %v953 = vrsqrt.pop %v753
      %v954 = vmul.f32 %v753, %v953
      %vm955 = vcmp.eq.f32.partialorder %v753, inf
      %v956 = vsel %vm955, %v753, %v954
      %vm957 = vcmp.eq.f32.partialorder %v753, 0.0
      %v958 = vand.u32 %v753, 2147483648
      %v959 = vsel %vm957, %v958, %v956
      %v960 = vrsqrt.pop %v754
      %v961 = vmul.f32 %v754, %v960
      %vm962 = vcmp.eq.f32.partialorder %v754, inf
      %v963 = vsel %vm962, %v754, %v961
      %vm964 = vcmp.eq.f32.partialorder %v754, 0.0
      %v965 = vand.u32 %v754, 2147483648
      %v966 = vsel %vm964, %v965, %v963
      %v967 = vrsqrt.pop %v755
      %v968 = vmul.f32 %v755, %v967
      %vm969 = vcmp.eq.f32.partialorder %v755, inf
      %v970 = vsel %vm969, %v755, %v968
      %vm971 = vcmp.eq.f32.partialorder %v755, 0.0
      %v972 = vand.u32 %v755, 2147483648
      %v973 = vsel %vm971, %v972, %v970
      %v974 = vrsqrt.pop %v756
      %v975 = vmul.f32 %v756, %v974
      %vm976 = vcmp.eq.f32.partialorder %v756, inf
      %v977 = vsel %vm976, %v756, %v975
      %vm978 = vcmp.eq.f32.partialorder %v756, 0.0
      %v979 = vand.u32 %v756, 2147483648
      %v980 = vsel %vm978, %v979, %v977
      %v1013 = vlaneseq
      %v1014 = vand.u32 %v1013, 127
      %v1015 = vlaneseq
      %v1016 = vshrl.u32 %v1015, 7
      %v1017 = vsub.s32 %v1014, %v1016
      %v1018 = vrot.slane %v597, %v1017
      %v1019 = vadd.s32 %v1014, 4294967288
      %v1020 = vlaneseq
      %v1021 = vshrl.u32 %v1020, 7
      %v1022 = vsub.s32 %v1019, %v1021
      %v1023 = vrot.slane %v598, %v1022
      %vm1024 = vcmask 130112
      %v1025 = vsel %vm1024, %v1023, %v1018
      %v1026 = vadd.s32 %v1014, 4294967280
      %v1027 = vlaneseq
      %v1028 = vshrl.u32 %v1027, 7
      %v1029 = vsub.s32 %v1026, %v1028
      %v1030 = vrot.slane %v599, %v1029
      %vm1031 = vcmask 195712
      %v1032 = vsel %vm1031, %v1030, %v1025
      %v1033 = vadd.s32 %v1014, 4294967272
      %v1034 = vlaneseq
      %v1035 = vshrl.u32 %v1034, 7
      %v1036 = vsub.s32 %v1033, %v1035
      %v1037 = vrot.slane %v600, %v1036
      %vm1038 = vcmask 261312
      %v1039 = vsel %vm1038, %v1037, %v1032
      %v1040 = vlaneseq
      %v1041 = vshrl.u32 %v1040, 7
      %v1042 = vsub.s32 %v1014, %v1041
      %v1043 = vrot.slane %v601, %v1042
      %v1044 = vlaneseq
      %v1045 = vshrl.u32 %v1044, 7
      %v1046 = vsub.s32 %v1019, %v1045
      %v1047 = vrot.slane %v602, %v1046
      %v1048 = vsel %vm1024, %v1047, %v1043
      %v1049 = vlaneseq
      %v1050 = vshrl.u32 %v1049, 7
      %v1051 = vsub.s32 %v1026, %v1050
      %v1052 = vrot.slane %v603, %v1051
      %v1053 = vsel %vm1031, %v1052, %v1048
      %v1054 = vlaneseq
      %v1055 = vshrl.u32 %v1054, 7
      %v1056 = vsub.s32 %v1033, %v1055
      %v1057 = vrot.slane %v604, %v1056
      %v1058 = vsel %vm1038, %v1057, %v1053
      %v1059 = vlaneseq
      %v1060 = vshrl.u32 %v1059, 7
      %v1061 = vsub.s32 %v1014, %v1060
      %v1062 = vrot.slane %v605, %v1061
      %v1063 = vlaneseq
      %v1064 = vshrl.u32 %v1063, 7
      %v1065 = vsub.s32 %v1019, %v1064
      %v1066 = vrot.slane %v606, %v1065
      %v1067 = vsel %vm1024, %v1066, %v1062
      %v1068 = vlaneseq
      %v1069 = vshrl.u32 %v1068, 7
      %v1070 = vsub.s32 %v1026, %v1069
      %v1071 = vrot.slane %v607, %v1070
      %v1072 = vsel %vm1031, %v1071, %v1067
      %v1073 = vlaneseq
      %v1074 = vshrl.u32 %v1073, 7
      %v1075 = vsub.s32 %v1033, %v1074
      %v1076 = vrot.slane %v608, %v1075
      %v1077 = vsel %vm1038, %v1076, %v1072
      %v1078 = vlaneseq
      %v1079 = vshrl.u32 %v1078, 7
      %v1080 = vsub.s32 %v1014, %v1079
      %v1081 = vrot.slane %v609, %v1080
      %v1082 = vlaneseq
      %v1083 = vshrl.u32 %v1082, 7
      %v1084 = vsub.s32 %v1019, %v1083
      %v1085 = vrot.slane %v610, %v1084
      %v1086 = vsel %vm1024, %v1085, %v1081
      %v1087 = vlaneseq
      %v1088 = vshrl.u32 %v1087, 7
      %v1089 = vsub.s32 %v1026, %v1088
      %v1090 = vrot.slane %v611, %v1089
      %v1091 = vsel %vm1031, %v1090, %v1086
      %v1092 = vlaneseq
      %v1093 = vshrl.u32 %v1092, 7
      %v1094 = vsub.s32 %v1033, %v1093
      %v1095 = vrot.slane %v612, %v1094
      %v1096 = vsel %vm1038, %v1095, %v1091
      %v1097 = vlaneseq
      %v1098 = vshrl.u32 %v1097, 7
      %v1099 = vsub.s32 %v1014, %v1098
      %v1100 = vrot.slane %v613, %v1099
      %v1101 = vlaneseq
      %v1102 = vshrl.u32 %v1101, 7
      %v1103 = vsub.s32 %v1019, %v1102
      %v1104 = vrot.slane %v614, %v1103
      %v1105 = vsel %vm1024, %v1104, %v1100
      %v1106 = vlaneseq
      %v1107 = vshrl.u32 %v1106, 7
      %v1108 = vsub.s32 %v1026, %v1107
      %v1109 = vrot.slane %v615, %v1108
      %v1110 = vsel %vm1031, %v1109, %v1105
      %v1111 = vlaneseq
      %v1112 = vshrl.u32 %v1111, 7
      %v1113 = vsub.s32 %v1033, %v1112
      %v1114 = vrot.slane %v616, %v1113
      %v1115 = vsel %vm1038, %v1114, %v1110
      %v1116 = vlaneseq
      %v1117 = vshrl.u32 %v1116, 7
      %v1118 = vsub.s32 %v1014, %v1117
      %v1119 = vrot.slane %v617, %v1118
      %v1120 = vlaneseq
      %v1121 = vshrl.u32 %v1120, 7
      %v1122 = vsub.s32 %v1019, %v1121
      %v1123 = vrot.slane %v618, %v1122
      %v1124 = vsel %vm1024, %v1123, %v1119
      %v1125 = vlaneseq
      %v1126 = vshrl.u32 %v1125, 7
      %v1127 = vsub.s32 %v1026, %v1126
      %v1128 = vrot.slane %v619, %v1127
      %v1129 = vsel %vm1031, %v1128, %v1124
      %v1130 = vlaneseq
      %v1131 = vshrl.u32 %v1130, 7
      %v1132 = vsub.s32 %v1033, %v1131
      %v1133 = vrot.slane %v620, %v1132
      %v1134 = vsel %vm1038, %v1133, %v1129
      %v1135 = vlaneseq
      %v1136 = vshrl.u32 %v1135, 7
      %v1137 = vsub.s32 %v1014, %v1136
      %v1138 = vrot.slane %v621, %v1137
      %v1139 = vlaneseq
      %v1140 = vshrl.u32 %v1139, 7
      %v1141 = vsub.s32 %v1019, %v1140
      %v1142 = vrot.slane %v622, %v1141
      %v1143 = vsel %vm1024, %v1142, %v1138
      %v1144 = vlaneseq
      %v1145 = vshrl.u32 %v1144, 7
      %v1146 = vsub.s32 %v1026, %v1145
      %v1147 = vrot.slane %v623, %v1146
      %v1148 = vsel %vm1031, %v1147, %v1143
      %v1149 = vlaneseq
      %v1150 = vshrl.u32 %v1149, 7
      %v1151 = vsub.s32 %v1033, %v1150
      %v1152 = vrot.slane %v624, %v1151
      %v1153 = vsel %vm1038, %v1152, %v1148
      %v1154 = vlaneseq
      %v1155 = vshrl.u32 %v1154, 7
      %v1156 = vsub.s32 %v1014, %v1155
      %v1157 = vrot.slane %v625, %v1156
      %v1158 = vlaneseq
      %v1159 = vshrl.u32 %v1158, 7
      %v1160 = vsub.s32 %v1019, %v1159
      %v1161 = vrot.slane %v626, %v1160
      %v1162 = vsel %vm1024, %v1161, %v1157
      %v1163 = vlaneseq
      %v1164 = vshrl.u32 %v1163, 7
      %v1165 = vsub.s32 %v1026, %v1164
      %v1166 = vrot.slane %v627, %v1165
      %v1167 = vsel %vm1031, %v1166, %v1162
      %v1168 = vlaneseq
      %v1169 = vshrl.u32 %v1168, 7
      %v1170 = vsub.s32 %v1033, %v1169
      %v1171 = vrot.slane %v628, %v1170
      %v1172 = vsel %vm1038, %v1171, %v1167
      %vm1173 = vcmask 1041409
      %v1174 = vsel %vm1173, %v1058, %v1039
      %vm1175 = vcmask 1042434
      %v1176 = vsel %vm1175, %v1077, %v1174
      %vm1177 = vcmask 1043459
      %v1178 = vsel %vm1177, %v1096, %v1176
      %vm1179 = vcmask 1044484
      %v1180 = vsel %vm1179, %v1115, %v1178
      %vm1181 = vcmask 1045509
      %v1182 = vsel %vm1181, %v1134, %v1180
      %vm1183 = vcmask 1046534
      %v1184 = vsel %vm1183, %v1153, %v1182
      %vm1185 = vcmask 1047559
      %v1186 = vsel %vm1185, %v1172, %v1184
      %vm1188 = vcmask 261120
      %1189 = vst.msk [vmem:[#allocation4] sm:$0xff] %vm1188, %v1186
      %v1222 = vlaneseq
      %v1223 = vshrl.u32 %v1222, 7
      %v1224 = vsub.s32 %v1014, %v1223
      %v1225 = vrot.slane %v763, %v1224
      %v1226 = vlaneseq
      %v1227 = vshrl.u32 %v1226, 7
      %v1228 = vsub.s32 %v1019, %v1227
      %v1229 = vrot.slane %v770, %v1228
      %v1230 = vsel %vm1024, %v1229, %v1225
      %v1231 = vlaneseq
      %v1232 = vshrl.u32 %v1231, 7
      %v1233 = vsub.s32 %v1026, %v1232
      %v1234 = vrot.slane %v777, %v1233
      %v1235 = vsel %vm1031, %v1234, %v1230
      %v1236 = vlaneseq
      %v1237 = vshrl.u32 %v1236, 7
      %v1238 = vsub.s32 %v1033, %v1237
      %v1239 = vrot.slane %v784, %v1238
      %v1240 = vsel %vm1038, %v1239, %v1235
      %v1241 = vlaneseq
      %v1242 = vshrl.u32 %v1241, 7
      %v1243 = vsub.s32 %v1014, %v1242
      %v1244 = vrot.slane %v791, %v1243
      %v1245 = vlaneseq
      %v1246 = vshrl.u32 %v1245, 7
      %v1247 = vsub.s32 %v1019, %v1246
      %v1248 = vrot.slane %v798, %v1247
      %v1249 = vsel %vm1024, %v1248, %v1244
      %v1250 = vlaneseq
      %v1251 = vshrl.u32 %v1250, 7
      %v1252 = vsub.s32 %v1026, %v1251
      %v1253 = vrot.slane %v805, %v1252
      %v1254 = vsel %vm1031, %v1253, %v1249
      %v1255 = vlaneseq
      %v1256 = vshrl.u32 %v1255, 7
      %v1257 = vsub.s32 %v1033, %v1256
      %v1258 = vrot.slane %v812, %v1257
      %v1259 = vsel %vm1038, %v1258, %v1254
      %v1260 = vlaneseq
      %v1261 = vshrl.u32 %v1260, 7
      %v1262 = vsub.s32 %v1014, %v1261
      %v1263 = vrot.slane %v819, %v1262
      %v1264 = vlaneseq
      %v1265 = vshrl.u32 %v1264, 7
      %v1266 = vsub.s32 %v1019, %v1265
      %v1267 = vrot.slane %v826, %v1266
      %v1268 = vsel %vm1024, %v1267, %v1263
      %v1269 = vlaneseq
      %v1270 = vshrl.u32 %v1269, 7
      %v1271 = vsub.s32 %v1026, %v1270
      %v1272 = vrot.slane %v833, %v1271
      %v1273 = vsel %vm1031, %v1272, %v1268
      %v1274 = vlaneseq
      %v1275 = vshrl.u32 %v1274, 7
      %v1276 = vsub.s32 %v1033, %v1275
      %v1277 = vrot.slane %v840, %v1276
      %v1278 = vsel %vm1038, %v1277, %v1273
      %v1279 = vlaneseq
      %v1280 = vshrl.u32 %v1279, 7
      %v1281 = vsub.s32 %v1014, %v1280
      %v1282 = vrot.slane %v847, %v1281
      %v1283 = vlaneseq
      %v1284 = vshrl.u32 %v1283, 7
      %v1285 = vsub.s32 %v1019, %v1284
      %v1286 = vrot.slane %v854, %v1285
      %v1287 = vsel %vm1024, %v1286, %v1282
      %v1288 = vlaneseq
      %v1289 = vshrl.u32 %v1288, 7
      %v1290 = vsub.s32 %v1026, %v1289
      %v1291 = vrot.slane %v861, %v1290
      %v1292 = vsel %vm1031, %v1291, %v1287
      %v1293 = vlaneseq
      %v1294 = vshrl.u32 %v1293, 7
      %v1295 = vsub.s32 %v1033, %v1294
      %v1296 = vrot.slane %v868, %v1295
      %v1297 = vsel %vm1038, %v1296, %v1292
      %v1298 = vlaneseq
      %v1299 = vshrl.u32 %v1298, 7
      %v1300 = vsub.s32 %v1014, %v1299
      %v1301 = vrot.slane %v875, %v1300
      %v1302 = vlaneseq
      %v1303 = vshrl.u32 %v1302, 7
      %v1304 = vsub.s32 %v1019, %v1303
      %v1305 = vrot.slane %v882, %v1304
      %v1306 = vsel %vm1024, %v1305, %v1301
      %v1307 = vlaneseq
      %v1308 = vshrl.u32 %v1307, 7
      %v1309 = vsub.s32 %v1026, %v1308
      %v1310 = vrot.slane %v889, %v1309
      %v1311 = vsel %vm1031, %v1310, %v1306
      %v1312 = vlaneseq
      %v1313 = vshrl.u32 %v1312, 7
      %v1314 = vsub.s32 %v1033, %v1313
      %v1315 = vrot.slane %v896, %v1314
      %v1316 = vsel %vm1038, %v1315, %v1311
      %v1317 = vlaneseq
      %v1318 = vshrl.u32 %v1317, 7
      %v1319 = vsub.s32 %v1014, %v1318
      %v1320 = vrot.slane %v903, %v1319
      %v1321 = vlaneseq
      %v1322 = vshrl.u32 %v1321, 7
      %v1323 = vsub.s32 %v1019, %v1322
      %v1324 = vrot.slane %v910, %v1323
      %v1325 = vsel %vm1024, %v1324, %v1320
      %v1326 = vlaneseq
      %v1327 = vshrl.u32 %v1326, 7
      %v1328 = vsub.s32 %v1026, %v1327
      %v1329 = vrot.slane %v917, %v1328
      %v1330 = vsel %vm1031, %v1329, %v1325
      %v1331 = vlaneseq
      %v1332 = vshrl.u32 %v1331, 7
      %v1333 = vsub.s32 %v1033, %v1332
      %v1334 = vrot.slane %v924, %v1333
      %v1335 = vsel %vm1038, %v1334, %v1330
      %v1336 = vlaneseq
      %v1337 = vshrl.u32 %v1336, 7
      %v1338 = vsub.s32 %v1014, %v1337
      %v1339 = vrot.slane %v931, %v1338
      %v1340 = vlaneseq
      %v1341 = vshrl.u32 %v1340, 7
      %v1342 = vsub.s32 %v1019, %v1341
      %v1343 = vrot.slane %v938, %v1342
      %v1344 = vsel %vm1024, %v1343, %v1339
      %v1345 = vlaneseq
      %v1346 = vshrl.u32 %v1345, 7
      %v1347 = vsub.s32 %v1026, %v1346
      %v1348 = vrot.slane %v945, %v1347
      %v1349 = vsel %vm1031, %v1348, %v1344
      %v1350 = vlaneseq
      %v1351 = vshrl.u32 %v1350, 7
      %v1352 = vsub.s32 %v1033, %v1351
      %v1353 = vrot.slane %v952, %v1352
      %v1354 = vsel %vm1038, %v1353, %v1349
      %v1355 = vlaneseq
      %v1356 = vshrl.u32 %v1355, 7
      %v1357 = vsub.s32 %v1014, %v1356
      %v1358 = vrot.slane %v959, %v1357
      %v1359 = vlaneseq
      %v1360 = vshrl.u32 %v1359, 7
      %v1361 = vsub.s32 %v1019, %v1360
      %v1362 = vrot.slane %v966, %v1361
      %v1363 = vsel %vm1024, %v1362, %v1358
      %v1364 = vlaneseq
      %v1365 = vshrl.u32 %v1364, 7
      %v1366 = vsub.s32 %v1026, %v1365
      %v1367 = vrot.slane %v973, %v1366
      %v1368 = vsel %vm1031, %v1367, %v1363
      %v1369 = vlaneseq
      %v1370 = vshrl.u32 %v1369, 7
      %v1371 = vsub.s32 %v1033, %v1370
      %v1372 = vrot.slane %v980, %v1371
      %v1373 = vsel %vm1038, %v1372, %v1368
      %v1374 = vsel %vm1173, %v1259, %v1240
      %v1375 = vsel %vm1175, %v1278, %v1374
      %v1376 = vsel %vm1177, %v1297, %v1375
      %v1377 = vsel %vm1179, %v1316, %v1376
      %v1378 = vsel %vm1181, %v1335, %v1377
      %v1379 = vsel %vm1183, %v1354, %v1378
      %v1380 = vsel %vm1185, %v1373, %v1379
      %1382 = vst.msk [vmem:[#allocation6] sm:$0xff] %vm1188, %v1380
    $region13: #{tpu_custom_call.1} parent=1 // pred_fallthru
      _
    // Predicated region
    $region14: #{tpu_custom_call.1} parent=1 // pred_check
      _
    $region15: #{tpu_custom_call.1} parent=1 // pred_check_branch
      %1384 = sbr.rel (0) target = $region17
    $region16: #{tpu_custom_call.1} parent=1 // pred_region
      %s1386 = ssub.s32 128, 32
      %1387 = vsyncadd [#allocation5], %s1386
      %s1388 = sshll.u32 [#allocation4], 4
      %s1389 = int_to_ptr.vmem [resolvable:$true] %s1388
      %1394 = dma.vmem_to_hbm [thread:$0]  %s1389, 32, %s1, [#allocation5], 32, 32, 2
    $region17: #{tpu_custom_call.1} parent=1 // pred_fallthru
      _
    // Predicated region
    $region18: #{tpu_custom_call.1} parent=1 // pred_check
      _
    $region19: #{tpu_custom_call.1} parent=1 // pred_check_branch
      %1396 = sbr.rel (0) target = $region21
    $region20: #{tpu_custom_call.1} parent=1 // pred_region
      %s1398 = ssub.s32 128, 32
      %1399 = vsyncadd [#allocation7], %s1398
      %s1400 = sshll.u32 [#allocation6], 4
      %s1401 = int_to_ptr.vmem [resolvable:$true] %s1400
      %1406 = dma.vmem_to_hbm [thread:$0]  %s1401, 32, %s2, [#allocation7], 32, 32, 2
    $region21: #{tpu_custom_call.1} parent=1 // pred_fallthru
      _
    // Predicated region
    $region22: #{tpu_custom_call.1} parent=1 // pred_check
      _
    $region23: #{tpu_custom_call.1} parent=1 // pred_check_branch
      %1408 = sbr.rel (0) target = $region25
    $region24: #{tpu_custom_call.1} parent=1 // pred_region
      %1409 = dma.done [#allocation5], 128
    $region25: #{tpu_custom_call.1} parent=1 // pred_fallthru
      _
    // Predicated region
    $region26: #{tpu_custom_call.1} parent=1 // pred_check
      _
    $region27: #{tpu_custom_call.1} parent=1 // pred_check_branch
      %1411 = sbr.rel (0) target = $region29
    $region28: #{tpu_custom_call.1} parent=1 // pred_region
      %1412 = dma.done [#allocation7], 128
    $region29: #{tpu_custom_call.1} parent=1 // pred_fallthru
      _
    %1413 = vsyncpa [#allocation5], 1
    %1414 = vsyncpa [#allocation7], 1

</llo_original>
